<compile_context>
chip_gen: v6e
topology: v6e:2x2x1
jax: 0.10.0
libtpu: 0.0.40
codegen_flags: <defaults>
</compile_context>

<pallas_src>
import jax
import jax.numpy as jnp
from jax import lax
from jax.experimental import pallas as pl
from jax.experimental.pallas import tpu as pltpu

# ---------------- configuration (small synthetic shapes) ----------------
B = 2            # batch
C_IN = 4         # input channels
H = W = 16       # spatial
KH = KW = 3      # conv kernel
K = C_IN * KH * KW          # 36
K_PAD = 128                 # conv contraction dim zero-padded to a full lane tile
FEAT = 32        # feature_extractor.output_num()
BOTTLE = 32      # args.model.bottle_neck_dim
NUM_CLASS = 3    # args.train.num_class / args.model.num_class
SUBJ = 32        # args.model.source_subject_no (must equal BOTTLE, see forward chaining)
HIDDEN = 64      # AdversarialNetwork hidden width
HW = H * W                  # 256
BHW = B * HW                # 512
LANE = 128

# ---------------- slab layouts (shared between wrapper packing and kernel slicing) ----
_W_LAYOUT = [            # (name, rows, cols) stacked vertically, cols <= 128
    ("wb",  FEAT,   BOTTLE),
    ("wfc", BOTTLE, NUM_CLASS),
    ("sw1", BOTTLE, HIDDEN),
    ("sw2", HIDDEN, HIDDEN),
    ("sw3", HIDDEN, SUBJ),
    ("dw1", SUBJ,   HIDDEN),
    ("dw2", HIDDEN, HIDDEN),
    ("dw3", HIDDEN, NUM_CLASS),
]
_W_SLICES = {}
_off = 0
for _name, _r, _c in _W_LAYOUT:
    _W_SLICES[_name] = (_off, _r, _c)
    _off += _r
W_SLAB_ROWS = _off           # 384 (every offset is a multiple of 8 -> sublane-aligned)

_B_LAYOUT = [                # (name, width) -> one row each in the bias slab
    ("conv_b", FEAT), ("bb", BOTTLE), ("bfc", NUM_CLASS),
    ("sb1", HIDDEN), ("sb2", HIDDEN), ("sb3", SUBJ),
    ("db1", HIDDEN), ("db2", HIDDEN), ("db3", NUM_CLASS),
]
_B_SLICES = {name: (i, d) for i, (name, d) in enumerate(_B_LAYOUT)}
B_SLAB_ROWS = 16             # 9 rows padded up to a sublane multiple

# packed output slab: each segment starts on a 128-lane tile boundary so the in-kernel
# stores need no lane rotation and the writeback is one lane-dense DMA.
Y_OFF, D_OFF, D0_OFF = 0, 128, 256
OUT_W = 384


# ---------------- Pallas kernel ----------------
def _softmax(z):
    z = z - jnp.max(z, axis=-1, keepdims=True)
    e = jnp.exp(z)
    # approximate reciprocal runs on the EUP slot (effectively free)
    return e * pl.reciprocal(jnp.sum(e, axis=-1, keepdims=True), approx=True)


def totalnet_kernel(patches_ref, conv_w_ref, w_slab_ref, b_slab_ref, out_ref):
    def weight(name):
        off, r, c = _W_SLICES[name]
        return w_slab_ref[off:off + r, 0:c]

    def bias(name):
        row, d = _B_SLICES[name]
        return b_slab_ref[row:row + 1, 0:d]

    # ---- feature extractor stand-in: conv-as-matmul (bf16 in, f32 acc) + bias + ReLU
    conv = jnp.dot(patches_ref[...], conv_w_ref[...],
                   preferred_element_type=jnp.float32)                 # [B*HW, FEAT]
    conv = jnp.maximum(conv + bias("conv_b"), 0.0)

    # global average pool per batch element as a block-diagonal averaging matmul on the
    # MXU (avoids reshape + sublane reduction and any transpose).
    row = lax.broadcasted_iota(jnp.int32, (B, BHW), 0)
    col = lax.broadcasted_iota(jnp.int32, (B, BHW), 1)
    pool = jnp.where((col >= row * HW) & (col < (row + 1) * HW),
                     1.0 / HW, 0.0).astype(jnp.float32)                # [B, B*HW]
    f = jnp.dot(pool, conv, preferred_element_type=jnp.float32)        # [B, FEAT]

    # ---- CLS: bottleneck -> fc -> softmax
    bneck = jnp.dot(f, weight("wb"), preferred_element_type=jnp.float32) + bias("bb")
    logits = jnp.dot(bneck, weight("wfc"), preferred_element_type=jnp.float32) + bias("bfc")
    y = _softmax(logits)                                               # [B, NUM_CLASS]

    # ---- subjectfusion AdversarialNetwork (GRL / dropout identity at inference)
    h = jnp.maximum(jnp.dot(bneck, weight("sw1"), preferred_element_type=jnp.float32) + bias("sb1"), 0.0)
    h = jnp.maximum(jnp.dot(h, weight("sw2"), preferred_element_type=jnp.float32) + bias("sb2"), 0.0)
    s_logits = jnp.dot(h, weight("sw3"), preferred_element_type=jnp.float32) + bias("sb3")
    d = _softmax(s_logits)                                             # [B, SUBJ]

    # ---- DAdiscriminator fed the re-bound "_" (= subjectfusion logits)
    g = jnp.maximum(jnp.dot(s_logits, weight("dw1"), preferred_element_type=jnp.float32) + bias("db1"), 0.0)
    g = jnp.maximum(jnp.dot(g, weight("dw2"), preferred_element_type=jnp.float32) + bias("db2"), 0.0)
    d0 = jnp.dot(g, weight("dw3"), preferred_element_type=jnp.float32) + bias("db3")  # [B, NUM_CLASS]

    # ---- pack everything into one lane-dense output slab (segments 128-lane aligned)
    out_ref[...] = jnp.zeros_like(out_ref)
    out_ref[:, Y_OFF:Y_OFF + NUM_CLASS] = y
    out_ref[:, D_OFF:D_OFF + SUBJ] = d
    out_ref[:, D0_OFF:D0_OFF + NUM_CLASS] = d0


# ---------------- glue: im2col + slab packing + pallas_call wrapper ----------------
def im2col_nchw(x_nchw):
    """NCHW, 3x3, stride 1, padding 1 -> [B, H*W, C*9] with (c, kh, kw) minor ordering."""
    b, c, h, w = x_nchw.shape
    xp = jnp.pad(x_nchw, ((0, 0), (0, 0), (1, 1), (1, 1)))
    cols = []
    for ci in range(c):
        for i in range(KH):
            for j in range(KW):
                cols.append(xp[:, ci, i:i + h, j:j + w])       # [B, H, W]
    patches = jnp.stack(cols, axis=-1)                          # [B, H, W, C*9]
    return patches.reshape(b, h * w, c * KH * KW)


def pack_weight_slab(params):
    slab = jnp.zeros((W_SLAB_ROWS, LANE), jnp.float32)
    for name, r, c in _W_LAYOUT:
        off = _W_SLICES[name][0]
        slab = slab.at[off:off + r, 0:c].set(params[name].astype(jnp.float32))
    return slab


def pack_bias_slab(params):
    slab = jnp.zeros((B_SLAB_ROWS, LANE), jnp.float32)
    for name, dim in _B_LAYOUT:
        row = _B_SLICES[name][0]
        slab = slab.at[row, 0:dim].set(params[name].reshape(dim).astype(jnp.float32))
    return slab


def totalnet_forward(x_nchw, params):
    # glue: im2col, flatten batch into the matmul M dimension, zero-pad K -> 128, bf16.
    patches = im2col_nchw(x_nchw).reshape(BHW, K)
    patches = jnp.pad(patches, ((0, 0), (0, K_PAD - K))).astype(jnp.bfloat16)   # [B*HW, 128]
    conv_w = jnp.pad(params["conv_w"], ((0, K_PAD - K), (0, 0))).astype(jnp.bfloat16)  # [128, FEAT]
    # (In production these slabs would be packed once outside the step; cheap either way.)
    w_slab = pack_weight_slab(params)                                           # [384, 128]
    b_slab = pack_bias_slab(params)                                             # [16, 128]

    out = pl.pallas_call(
        totalnet_kernel,
        out_shape=jax.ShapeDtypeStruct((B, OUT_W), jnp.float32),
        grid=(1,),   # single fused invocation for the whole batch
        in_specs=[
            pl.BlockSpec((BHW, K_PAD), lambda i: (0, 0)),
            pl.BlockSpec((K_PAD, FEAT), lambda i: (0, 0)),
            pl.BlockSpec((W_SLAB_ROWS, LANE), lambda i: (0, 0)),
            pl.BlockSpec((B_SLAB_ROWS, LANE), lambda i: (0, 0)),
        ],
        out_specs=pl.BlockSpec((B, OUT_W), lambda i: (0, 0)),
        compiler_params=pltpu.CompilerParams(dimension_semantics=("arbitrary",)),
    )(patches, conv_w, w_slab, b_slab)

    y = out[:, Y_OFF:Y_OFF + NUM_CLASS]
    d = out[:, D_OFF:D_OFF + SUBJ]
    d0 = out[:, D0_OFF:D0_OFF + NUM_CLASS]
    return y, d, d0


# ---------------- deterministic parameter init ----------------
def init_params(key):
    ks = jax.random.split(key, 20)

    def w(k, shape):
        fan_in = shape[0]
        return jax.random.normal(k, shape, jnp.float32) / jnp.sqrt(jnp.float32(fan_in))

    def bvec(k, dim):
        return 0.01 * jax.random.normal(k, (1, dim), jnp.float32)

    return {
        # conv 3x3 (C_IN -> FEAT), stored in im2col layout [C*KH*KW, FEAT]
        "conv_w": w(ks[0], (K, FEAT)), "conv_b": bvec(ks[1], FEAT),
        # CLS
        "wb": w(ks[2], (FEAT, BOTTLE)), "bb": bvec(ks[3], BOTTLE),
        "wfc": w(ks[4], (BOTTLE, NUM_CLASS)), "bfc": bvec(ks[5], NUM_CLASS),
        # subjectfusion AdversarialNetwork(BOTTLE -> SUBJ)
        "sw1": w(ks[6], (BOTTLE, HIDDEN)), "sb1": bvec(ks[7], HIDDEN),
        "sw2": w(ks[8], (HIDDEN, HIDDEN)), "sb2": bvec(ks[9], HIDDEN),
        "sw3": w(ks[10], (HIDDEN, SUBJ)), "sb3": bvec(ks[11], SUBJ),
        # DAdiscriminator AdversarialNetwork(BOTTLE(=SUBJ) -> NUM_CLASS)
        "dw1": w(ks[12], (SUBJ, HIDDEN)), "db1": bvec(ks[13], HIDDEN),
        "dw2": w(ks[14], (HIDDEN, HIDDEN)), "db2": bvec(ks[15], HIDDEN),
        "dw3": w(ks[16], (HIDDEN, NUM_CLASS)), "db3": bvec(ks[17], NUM_CLASS),
    }


if __name__ == "__main__":
    key = jax.random.PRNGKey(0)
    kx, kp = jax.random.split(key)
    x = jax.random.normal(kx, (B, C_IN, H, W), jnp.float32)   # NCHW, like the PyTorch module
    params = init_params(kp)

    y, d, d_0 = jax.jit(totalnet_forward)(x, params)
    jax.block_until_ready((y, d, d_0))

    assert y.shape == (B, NUM_CLASS)
    assert d.shape == (B, SUBJ)
    assert d_0.shape == (B, NUM_CLASS)
    # y and d are softmax outputs -> rows sum to ~1 (loose tol: approx EUP reciprocal + bf16 conv)
    assert jnp.allclose(jnp.sum(y, axis=-1), 1.0, atol=1e-2)
    assert jnp.allclose(jnp.sum(d, axis=-1), 1.0, atol=1e-2)
    assert bool(jnp.all(jnp.isfinite(d_0)))

    print("KERNEL_OK")
</pallas_src>

<mosaic_0001>
module attributes {stable_mosaic.version = 11 : i64} {
  func.func @totalnet_kernel(%arg0: i32, %arg1: memref<512x128xbf16, #tpu.memory_space<vmem>>, %arg2: memref<128x32xbf16, #tpu.memory_space<vmem>>, %arg3: memref<384x128xf32, #tpu.memory_space<vmem>>, %arg4: memref<16x128xf32, #tpu.memory_space<vmem>>, %arg5: memref<2x384xf32, #tpu.memory_space<vmem>>) attributes {dimension_semantics = [#tpu.dimension_semantics<arbitrary>], iteration_bounds = array<i64: 1>, scalar_prefetch = 0 : i64, scratch_operands = 0 : i64, tpu.core_type = #tpu.core_type<tc>, window_params = [{pipeline_mode = #tpu.pipeline_mode<synchronous>, transform_indices = @transform_0, window_bounds = array<i64: 512, 128>}, {pipeline_mode = #tpu.pipeline_mode<synchronous>, transform_indices = @transform_1, window_bounds = array<i64: 128, 32>}, {pipeline_mode = #tpu.pipeline_mode<synchronous>, transform_indices = @transform_2, window_bounds = array<i64: 384, 128>}, {pipeline_mode = #tpu.pipeline_mode<synchronous>, transform_indices = @transform_3, window_bounds = array<i64: 16, 128>}, {pipeline_mode = #tpu.pipeline_mode<synchronous>, transform_indices = @transform_4, window_bounds = array<i64: 2, 384>}]} {
    %c0 = arith.constant 0 : index
    %c0_0 = arith.constant 0 : index
    %0 = vector.load %arg1[%c0, %c0_0] : memref<512x128xbf16, #tpu.memory_space<vmem>>, vector<512x128xbf16>
    %c0_1 = arith.constant 0 : index
    %c0_2 = arith.constant 0 : index
    %1 = vector.load %arg2[%c0_1, %c0_2] : memref<128x32xbf16, #tpu.memory_space<vmem>>, vector<128x32xbf16>
    %cst = arith.constant dense<0.000000e+00> : vector<512x32xf32>
    %2 = tpu.matmul %0, %1, %cst {dimension_numbers = #tpu.dot_dimension_numbers<[1], [0], [0], [1], [0, 0, 1, 1], [], []>} : vector<512x128xbf16>, vector<128x32xbf16>, vector<512x32xf32> -> vector<512x32xf32>
    %c0_3 = arith.constant 0 : index
    %c0_4 = arith.constant 0 : index
    %3 = vector.load %arg4[%c0_3, %c0_4] : memref<16x128xf32, #tpu.memory_space<vmem>>, vector<1x32xf32>
    %4 = vector.broadcast %3 : vector<1x32xf32> to vector<512x32xf32>
    %5 = arith.addf %2, %4 : vector<512x32xf32>
    %cst_5 = arith.constant 0.000000e+00 : f32
    %6 = vector.broadcast %cst_5 : f32 to vector<512x32xf32>
    %7 = arith.maximumf %5, %6 : vector<512x32xf32>
    %8 = tpu.iota {dimensions = array<i32: 0>} : vector<2x512xi32>
    %9 = tpu.iota {dimensions = array<i32: 1>} : vector<2x512xi32>
    %c256_i32 = arith.constant 256 : i32
    %10 = vector.broadcast %c256_i32 : i32 to vector<2x512xi32>
    %11 = arith.muli %8, %10 : vector<2x512xi32>
    %12 = arith.cmpi sge, %9, %11 : vector<2x512xi32>
    %c1_i32 = arith.constant 1 : i32
    %13 = vector.broadcast %c1_i32 : i32 to vector<2x512xi32>
    %14 = arith.addi %8, %13 : vector<2x512xi32>
    %c256_i32_6 = arith.constant 256 : i32
    %15 = vector.broadcast %c256_i32_6 : i32 to vector<2x512xi32>
    %16 = arith.muli %14, %15 : vector<2x512xi32>
    %17 = arith.cmpi slt, %9, %16 : vector<2x512xi32>
    %18 = arith.andi %12, %17 : vector<2x512xi1>
    %cst_7 = arith.constant 3.906250e-03 : f32
    %cst_8 = arith.constant 0.000000e+00 : f32
    %19 = vector.broadcast %cst_7 : f32 to vector<2x512xf32>
    %20 = vector.broadcast %cst_8 : f32 to vector<2x512xf32>
    %21 = arith.select %18, %19, %20 : vector<2x512xi1>, vector<2x512xf32>
    %cst_9 = arith.constant dense<0.000000e+00> : vector<2x32xf32>
    %22 = tpu.matmul %21, %7, %cst_9 {dimension_numbers = #tpu.dot_dimension_numbers<[1], [0], [0], [1], [0, 0, 1, 1], [], []>} : vector<2x512xf32>, vector<512x32xf32>, vector<2x32xf32> -> vector<2x32xf32>
    %c0_10 = arith.constant 0 : index
    %c0_11 = arith.constant 0 : index
    %23 = vector.load %arg3[%c0_10, %c0_11] : memref<384x128xf32, #tpu.memory_space<vmem>>, vector<32x32xf32>
    %cst_12 = arith.constant dense<0.000000e+00> : vector<2x32xf32>
    %24 = tpu.matmul %22, %23, %cst_12 {dimension_numbers = #tpu.dot_dimension_numbers<[1], [0], [0], [1], [0, 0, 1, 1], [], []>} : vector<2x32xf32>, vector<32x32xf32>, vector<2x32xf32> -> vector<2x32xf32>
    %c1 = arith.constant 1 : index
    %c0_13 = arith.constant 0 : index
    %25 = vector.load %arg4[%c1, %c0_13] : memref<16x128xf32, #tpu.memory_space<vmem>>, vector<1x32xf32>
    %26 = vector.broadcast %25 : vector<1x32xf32> to vector<2x32xf32>
    %27 = arith.addf %24, %26 : vector<2x32xf32>
    %c32 = arith.constant 32 : index
    %c0_14 = arith.constant 0 : index
    %28 = vector.load %arg3[%c32, %c0_14] : memref<384x128xf32, #tpu.memory_space<vmem>>, vector<32x3xf32>
    %cst_15 = arith.constant dense<0.000000e+00> : vector<2x3xf32>
    %29 = tpu.matmul %27, %28, %cst_15 {dimension_numbers = #tpu.dot_dimension_numbers<[1], [0], [0], [1], [0, 0, 1, 1], [], []>} : vector<2x32xf32>, vector<32x3xf32>, vector<2x3xf32> -> vector<2x3xf32>
    %c2 = arith.constant 2 : index
    %c0_16 = arith.constant 0 : index
    %30 = vector.load %arg4[%c2, %c0_16] : memref<16x128xf32, #tpu.memory_space<vmem>>, vector<1x3xf32>
    %31 = vector.broadcast %30 : vector<1x3xf32> to vector<2x3xf32>
    %32 = arith.addf %29, %31 : vector<2x3xf32>
    %cst_17 = arith.constant dense<0xFF800000> : vector<2xf32>
    %33 = vector.multi_reduction <maximumf>, %32, %cst_17 [1] : vector<2x3xf32> to vector<2xf32>
    %34 = vector.shape_cast %33 : vector<2xf32> to vector<2x1xf32>
    %35 = vector.broadcast %34 : vector<2x1xf32> to vector<2x3xf32>
    %36 = arith.subf %32, %35 : vector<2x3xf32>
    %37 = math.exp %36 : vector<2x3xf32>
    %cst_18 = arith.constant dense<0.000000e+00> : vector<2xf32>
    %38 = vector.multi_reduction <add>, %37, %cst_18 [1] : vector<2x3xf32> to vector<2xf32>
    %39 = vector.shape_cast %38 : vector<2xf32> to vector<2x1xf32>
    %40 = tpu.reciprocal %39 {approx = true} : vector<2x1xf32> -> vector<2x1xf32>
    %41 = vector.broadcast %40 : vector<2x1xf32> to vector<2x3xf32>
    %42 = arith.mulf %37, %41 : vector<2x3xf32>
    %c64 = arith.constant 64 : index
    %c0_19 = arith.constant 0 : index
    %43 = vector.load %arg3[%c64, %c0_19] : memref<384x128xf32, #tpu.memory_space<vmem>>, vector<32x64xf32>
    %cst_20 = arith.constant dense<0.000000e+00> : vector<2x64xf32>
    %44 = tpu.matmul %27, %43, %cst_20 {dimension_numbers = #tpu.dot_dimension_numbers<[1], [0], [0], [1], [0, 0, 1, 1], [], []>} : vector<2x32xf32>, vector<32x64xf32>, vector<2x64xf32> -> vector<2x64xf32>
    %c3 = arith.constant 3 : index
    %c0_21 = arith.constant 0 : index
    %45 = vector.load %arg4[%c3, %c0_21] : memref<16x128xf32, #tpu.memory_space<vmem>>, vector<1x64xf32>
    %46 = vector.broadcast %45 : vector<1x64xf32> to vector<2x64xf32>
    %47 = arith.addf %44, %46 : vector<2x64xf32>
    %cst_22 = arith.constant 0.000000e+00 : f32
    %48 = vector.broadcast %cst_22 : f32 to vector<2x64xf32>
    %49 = arith.maximumf %47, %48 : vector<2x64xf32>
    %c96 = arith.constant 96 : index
    %c0_23 = arith.constant 0 : index
    %50 = vector.load %arg3[%c96, %c0_23] : memref<384x128xf32, #tpu.memory_space<vmem>>, vector<64x64xf32>
    %cst_24 = arith.constant dense<0.000000e+00> : vector<2x64xf32>
    %51 = tpu.matmul %49, %50, %cst_24 {dimension_numbers = #tpu.dot_dimension_numbers<[1], [0], [0], [1], [0, 0, 1, 1], [], []>} : vector<2x64xf32>, vector<64x64xf32>, vector<2x64xf32> -> vector<2x64xf32>
    %c4 = arith.constant 4 : index
    %c0_25 = arith.constant 0 : index
    %52 = vector.load %arg4[%c4, %c0_25] : memref<16x128xf32, #tpu.memory_space<vmem>>, vector<1x64xf32>
    %53 = vector.broadcast %52 : vector<1x64xf32> to vector<2x64xf32>
    %54 = arith.addf %51, %53 : vector<2x64xf32>
    %cst_26 = arith.constant 0.000000e+00 : f32
    %55 = vector.broadcast %cst_26 : f32 to vector<2x64xf32>
    %56 = arith.maximumf %54, %55 : vector<2x64xf32>
    %c160 = arith.constant 160 : index
    %c0_27 = arith.constant 0 : index
    %57 = vector.load %arg3[%c160, %c0_27] : memref<384x128xf32, #tpu.memory_space<vmem>>, vector<64x32xf32>
    %cst_28 = arith.constant dense<0.000000e+00> : vector<2x32xf32>
    %58 = tpu.matmul %56, %57, %cst_28 {dimension_numbers = #tpu.dot_dimension_numbers<[1], [0], [0], [1], [0, 0, 1, 1], [], []>} : vector<2x64xf32>, vector<64x32xf32>, vector<2x32xf32> -> vector<2x32xf32>
    %c5 = arith.constant 5 : index
    %c0_29 = arith.constant 0 : index
    %59 = vector.load %arg4[%c5, %c0_29] : memref<16x128xf32, #tpu.memory_space<vmem>>, vector<1x32xf32>
    %60 = vector.broadcast %59 : vector<1x32xf32> to vector<2x32xf32>
    %61 = arith.addf %58, %60 : vector<2x32xf32>
    %cst_30 = arith.constant dense<0xFF800000> : vector<2xf32>
    %62 = vector.multi_reduction <maximumf>, %61, %cst_30 [1] : vector<2x32xf32> to vector<2xf32>
    %63 = vector.shape_cast %62 : vector<2xf32> to vector<2x1xf32>
    %64 = vector.broadcast %63 : vector<2x1xf32> to vector<2x32xf32>
    %65 = arith.subf %61, %64 : vector<2x32xf32>
    %66 = math.exp %65 : vector<2x32xf32>
    %cst_31 = arith.constant dense<0.000000e+00> : vector<2xf32>
    %67 = vector.multi_reduction <add>, %66, %cst_31 [1] : vector<2x32xf32> to vector<2xf32>
    %68 = vector.shape_cast %67 : vector<2xf32> to vector<2x1xf32>
    %69 = tpu.reciprocal %68 {approx = true} : vector<2x1xf32> -> vector<2x1xf32>
    %70 = vector.broadcast %69 : vector<2x1xf32> to vector<2x32xf32>
    %71 = arith.mulf %66, %70 : vector<2x32xf32>
    %c224 = arith.constant 224 : index
    %c0_32 = arith.constant 0 : index
    %72 = vector.load %arg3[%c224, %c0_32] : memref<384x128xf32, #tpu.memory_space<vmem>>, vector<32x64xf32>
    %cst_33 = arith.constant dense<0.000000e+00> : vector<2x64xf32>
    %73 = tpu.matmul %61, %72, %cst_33 {dimension_numbers = #tpu.dot_dimension_numbers<[1], [0], [0], [1], [0, 0, 1, 1], [], []>} : vector<2x32xf32>, vector<32x64xf32>, vector<2x64xf32> -> vector<2x64xf32>
    %c6 = arith.constant 6 : index
    %c0_34 = arith.constant 0 : index
    %74 = vector.load %arg4[%c6, %c0_34] : memref<16x128xf32, #tpu.memory_space<vmem>>, vector<1x64xf32>
    %75 = vector.broadcast %74 : vector<1x64xf32> to vector<2x64xf32>
    %76 = arith.addf %73, %75 : vector<2x64xf32>
    %cst_35 = arith.constant 0.000000e+00 : f32
    %77 = vector.broadcast %cst_35 : f32 to vector<2x64xf32>
    %78 = arith.maximumf %76, %77 : vector<2x64xf32>
    %c256 = arith.constant 256 : index
    %c0_36 = arith.constant 0 : index
    %79 = vector.load %arg3[%c256, %c0_36] : memref<384x128xf32, #tpu.memory_space<vmem>>, vector<64x64xf32>
    %cst_37 = arith.constant dense<0.000000e+00> : vector<2x64xf32>
    %80 = tpu.matmul %78, %79, %cst_37 {dimension_numbers = #tpu.dot_dimension_numbers<[1], [0], [0], [1], [0, 0, 1, 1], [], []>} : vector<2x64xf32>, vector<64x64xf32>, vector<2x64xf32> -> vector<2x64xf32>
    %c7 = arith.constant 7 : index
    %c0_38 = arith.constant 0 : index
    %81 = vector.load %arg4[%c7, %c0_38] : memref<16x128xf32, #tpu.memory_space<vmem>>, vector<1x64xf32>
    %82 = vector.broadcast %81 : vector<1x64xf32> to vector<2x64xf32>
    %83 = arith.addf %80, %82 : vector<2x64xf32>
    %cst_39 = arith.constant 0.000000e+00 : f32
    %84 = vector.broadcast %cst_39 : f32 to vector<2x64xf32>
    %85 = arith.maximumf %83, %84 : vector<2x64xf32>
    %c320 = arith.constant 320 : index
    %c0_40 = arith.constant 0 : index
    %86 = vector.load %arg3[%c320, %c0_40] : memref<384x128xf32, #tpu.memory_space<vmem>>, vector<64x3xf32>
    %cst_41 = arith.constant dense<0.000000e+00> : vector<2x3xf32>
    %87 = tpu.matmul %85, %86, %cst_41 {dimension_numbers = #tpu.dot_dimension_numbers<[1], [0], [0], [1], [0, 0, 1, 1], [], []>} : vector<2x64xf32>, vector<64x3xf32>, vector<2x3xf32> -> vector<2x3xf32>
    %c8 = arith.constant 8 : index
    %c0_42 = arith.constant 0 : index
    %88 = vector.load %arg4[%c8, %c0_42] : memref<16x128xf32, #tpu.memory_space<vmem>>, vector<1x3xf32>
    %89 = vector.broadcast %88 : vector<1x3xf32> to vector<2x3xf32>
    %90 = arith.addf %87, %89 : vector<2x3xf32>
    %cst_43 = arith.constant 0.000000e+00 : f32
    %91 = vector.broadcast %cst_43 : f32 to vector<2x384xf32>
    %c0_44 = arith.constant 0 : index
    %c0_45 = arith.constant 0 : index
    %92 = vector.load %arg5[%c0_44, %c0_45] : memref<2x384xf32, #tpu.memory_space<vmem>>, vector<2x384xf32>
    tpu.vector_store %arg5[%c0_44, %c0_45], %91 {strides = array<i32>} : memref<2x384xf32, #tpu.memory_space<vmem>>, vector<2x384xf32>,
    %c0_46 = arith.constant 0 : index
    %c0_47 = arith.constant 0 : index
    %93 = vector.load %arg5[%c0_46, %c0_47] : memref<2x384xf32, #tpu.memory_space<vmem>>, vector<2x3xf32>
    tpu.vector_store %arg5[%c0_46, %c0_47], %42 {strides = array<i32>} : memref<2x384xf32, #tpu.memory_space<vmem>>, vector<2x3xf32>,
    %c0_48 = arith.constant 0 : index
    %c128 = arith.constant 128 : index
    %94 = vector.load %arg5[%c0_48, %c128] : memref<2x384xf32, #tpu.memory_space<vmem>>, vector<2x32xf32>
    tpu.vector_store %arg5[%c0_48, %c128], %71 {strides = array<i32>} : memref<2x384xf32, #tpu.memory_space<vmem>>, vector<2x32xf32>,
    %c0_49 = arith.constant 0 : index
    %c256_50 = arith.constant 256 : index
    %95 = vector.load %arg5[%c0_49, %c256_50] : memref<2x384xf32, #tpu.memory_space<vmem>>, vector<2x3xf32>
    tpu.vector_store %arg5[%c0_49, %c256_50], %90 {strides = array<i32>} : memref<2x384xf32, #tpu.memory_space<vmem>>, vector<2x3xf32>,
    return
  }
  func.func @transform_0(%arg0: i32) -> (i32, i32) {
    %c0_i32 = arith.constant 0 : i32
    %c0_i32_0 = arith.constant 0 : i32
    %c0_i32_1 = arith.constant 0 : i32
    return %c0_i32, %c0_i32_0 : i32, i32
  }
  func.func @transform_1(%arg0: i32) -> (i32, i32) {
    %c0_i32 = arith.constant 0 : i32
    %c0_i32_0 = arith.constant 0 : i32
    %c0_i32_1 = arith.constant 0 : i32
    return %c0_i32, %c0_i32_0 : i32, i32
  }
  func.func @transform_2(%arg0: i32) -> (i32, i32) {
    %c0_i32 = arith.constant 0 : i32
    %c0_i32_0 = arith.constant 0 : i32
    %c0_i32_1 = arith.constant 0 : i32
    return %c0_i32, %c0_i32_0 : i32, i32
  }
  func.func @transform_3(%arg0: i32) -> (i32, i32) {
    %c0_i32 = arith.constant 0 : i32
    %c0_i32_0 = arith.constant 0 : i32
    %c0_i32_1 = arith.constant 0 : i32
    return %c0_i32, %c0_i32_0 : i32, i32
  }
  func.func @transform_4(%arg0: i32) -> (i32, i32) {
    %c0_i32 = arith.constant 0 : i32
    %c0_i32_0 = arith.constant 0 : i32
    %c0_i32_1 = arith.constant 0 : i32
    return %c0_i32, %c0_i32_0 : i32, i32
  }
}

</mosaic_0001>

<llo_original>
// kernel: totalnet_forward.1
$region0: #{totalnet_forward.1}
  #allocation0 [shape = 'u32[]', space=smem, size = 0x4, offset = 0x4, fixed_abs, tag = 'smem constant byte address 0x4 - core index']
  #allocation1 [shape = 'u32[144,128]{1,0:T(1,128)}', space=vmem, size = 0x12000, scoped, tag = 'internal scratch']
  %s0 = inlined_call_operand.vmem [shape: bf16[512,128], index: 0, kind: input, shape index: {}]
  %s1 = inlined_call_operand.vmem [shape: bf16[128,32], index: 1, kind: input, shape index: {}]
  %s2 = inlined_call_operand.vmem [shape: f32[384,128], index: 2, kind: input, shape index: {}]
  %s3 = inlined_call_operand.vmem [shape: f32[16,128], index: 3, kind: input, shape index: {}]
  %s4 = inlined_call_operand.vmem [shape: f32[2,384], index: 4, kind: output, shape index: {}]
  %s5 = sld [smem:[#allocation0]]
  $region26: #{totalnet_forward.1} parent=0
    _
  %s7 = ssub.s32 1, %s5
  %s8 = scalar_select 0, %s7, %s5
  // Predicated region
  $region2: #{totalnet_forward.1} parent=0 // pred_check
    _
  $region3: #{totalnet_forward.1} parent=0 // pred_check_branch
    %10 = sbr.rel (0) target = $region5
  $region4: #{totalnet_forward.1} parent=0 // pred_region
    _
  $region5: #{totalnet_forward.1} parent=0 // pred_fallthru
    _
  // Predicated region
  $region6: #{totalnet_forward.1} parent=0 // pred_check
    _
  $region7: #{totalnet_forward.1} parent=0 // pred_check_branch
    %12 = sbr.rel (0) target = $region9
  $region8: #{totalnet_forward.1} parent=0 // pred_region
    _
  $region9: #{totalnet_forward.1} parent=0 // pred_fallthru
    _
  // Predicated region
  $region10: #{totalnet_forward.1} parent=0 // pred_check
    _
  $region11: #{totalnet_forward.1} parent=0 // pred_check_branch
    %14 = sbr.rel (0) target = $region13
  $region12: #{totalnet_forward.1} parent=0 // pred_region
    _
  $region13: #{totalnet_forward.1} parent=0 // pred_fallthru
    _
  // Predicated region
  $region14: #{totalnet_forward.1} parent=0 // pred_check
    _
  $region15: #{totalnet_forward.1} parent=0 // pred_check_branch
    %16 = sbr.rel (0) target = $region17
  $region16: #{totalnet_forward.1} parent=0 // pred_region
    _
  $region17: #{totalnet_forward.1} parent=0 // pred_fallthru
    _
  %v18 = vld [vmem:[%s0] sm:$0xf]
  %v19 = vld [vmem:[%s0 + $0x4] sm:$0xf]
  %v20 = vld [vmem:[%s0 + $0x8] sm:$0xf]
  %v21 = vld [vmem:[%s0 + $0xc] sm:$0xf]
  %v22 = vld [vmem:[%s0 + $0x10] sm:$0xf]
  %v23 = vld [vmem:[%s0 + $0x14] sm:$0xf]
  %v24 = vld [vmem:[%s0 + $0x18] sm:$0xf]
  %v25 = vld [vmem:[%s0 + $0x1c] sm:$0xf]
  %v26 = vld [vmem:[%s0 + $0x20] sm:$0xf]
  %v27 = vld [vmem:[%s0 + $0x24] sm:$0xf]
  %v28 = vld [vmem:[%s0 + $0x28] sm:$0xf]
  %v29 = vld [vmem:[%s0 + $0x2c] sm:$0xf]
  %v30 = vld [vmem:[%s0 + $0x30] sm:$0xf]
  %v31 = vld [vmem:[%s0 + $0x34] sm:$0xf]
  %v32 = vld [vmem:[%s0 + $0x38] sm:$0xf]
  %v33 = vld [vmem:[%s0 + $0x3c] sm:$0xf]
  %v34 = vld [vmem:[%s0 + $0x40] sm:$0xf]
  %v35 = vld [vmem:[%s0 + $0x44] sm:$0xf]
  %v36 = vld [vmem:[%s0 + $0x48] sm:$0xf]
  %v37 = vld [vmem:[%s0 + $0x4c] sm:$0xf]
  %v38 = vld [vmem:[%s0 + $0x50] sm:$0xf]
  %v39 = vld [vmem:[%s0 + $0x54] sm:$0xf]
  %v40 = vld [vmem:[%s0 + $0x58] sm:$0xf]
  %v41 = vld [vmem:[%s0 + $0x5c] sm:$0xf]
  %v42 = vld [vmem:[%s0 + $0x60] sm:$0xf]
  %v43 = vld [vmem:[%s0 + $0x64] sm:$0xf]
  %v44 = vld [vmem:[%s0 + $0x68] sm:$0xf]
  %v45 = vld [vmem:[%s0 + $0x6c] sm:$0xf]
  %v46 = vld [vmem:[%s0 + $0x70] sm:$0xf]
  %v47 = vld [vmem:[%s0 + $0x74] sm:$0xf]
  %v48 = vld [vmem:[%s0 + $0x78] sm:$0xf]
  %v49 = vld [vmem:[%s0 + $0x7c] sm:$0xf]
  %v50 = vld [vmem:[%s0 + $0x80] sm:$0xf]
  %v51 = vld [vmem:[%s0 + $0x84] sm:$0xf]
  %v52 = vld [vmem:[%s0 + $0x88] sm:$0xf]
  %v53 = vld [vmem:[%s0 + $0x8c] sm:$0xf]
  %v54 = vld [vmem:[%s0 + $0x90] sm:$0xf]
  %v55 = vld [vmem:[%s0 + $0x94] sm:$0xf]
  %v56 = vld [vmem:[%s0 + $0x98] sm:$0xf]
  %v57 = vld [vmem:[%s0 + $0x9c] sm:$0xf]
  %v58 = vld [vmem:[%s0 + $0xa0] sm:$0xf]
  %v59 = vld [vmem:[%s0 + $0xa4] sm:$0xf]
  %v60 = vld [vmem:[%s0 + $0xa8] sm:$0xf]
  %v61 = vld [vmem:[%s0 + $0xac] sm:$0xf]
  %v62 = vld [vmem:[%s0 + $0xb0] sm:$0xf]
  %v63 = vld [vmem:[%s0 + $0xb4] sm:$0xf]
  %v64 = vld [vmem:[%s0 + $0xb8] sm:$0xf]
  %v65 = vld [vmem:[%s0 + $0xbc] sm:$0xf]
  %v66 = vld [vmem:[%s0 + $0xc0] sm:$0xf]
  %v67 = vld [vmem:[%s0 + $0xc4] sm:$0xf]
  %v68 = vld [vmem:[%s0 + $0xc8] sm:$0xf]
  %v69 = vld [vmem:[%s0 + $0xcc] sm:$0xf]
  %v70 = vld [vmem:[%s0 + $0xd0] sm:$0xf]
  %v71 = vld [vmem:[%s0 + $0xd4] sm:$0xf]
  %v72 = vld [vmem:[%s0 + $0xd8] sm:$0xf]
  %v73 = vld [vmem:[%s0 + $0xdc] sm:$0xf]
  %v74 = vld [vmem:[%s0 + $0xe0] sm:$0xf]
  %v75 = vld [vmem:[%s0 + $0xe4] sm:$0xf]
  %v76 = vld [vmem:[%s0 + $0xe8] sm:$0xf]
  %v77 = vld [vmem:[%s0 + $0xec] sm:$0xf]
  %v78 = vld [vmem:[%s0 + $0xf0] sm:$0xf]
  %v79 = vld [vmem:[%s0 + $0xf4] sm:$0xf]
  %v80 = vld [vmem:[%s0 + $0xf8] sm:$0xf]
  %v81 = vld [vmem:[%s0 + $0xfc] sm:$0xf]
  %v82 = vld [vmem:[%s1] sm:$0xf]
  %v83 = vld [vmem:[%s1 + $0x4] sm:$0xf]
  %v84 = vld [vmem:[%s1 + $0x8] sm:$0xf]
  %v85 = vld [vmem:[%s1 + $0xc] sm:$0xf]
  %v86 = vld [vmem:[%s1 + $0x10] sm:$0xf]
  %v87 = vld [vmem:[%s1 + $0x14] sm:$0xf]
  %v88 = vld [vmem:[%s1 + $0x18] sm:$0xf]
  %v89 = vld [vmem:[%s1 + $0x1c] sm:$0xf]
  %v90 = vld [vmem:[%s1 + $0x20] sm:$0xf]
  %v91 = vld [vmem:[%s1 + $0x24] sm:$0xf]
  %v92 = vld [vmem:[%s1 + $0x28] sm:$0xf]
  %v93 = vld [vmem:[%s1 + $0x2c] sm:$0xf]
  %v94 = vld [vmem:[%s1 + $0x30] sm:$0xf]
  %v95 = vld [vmem:[%s1 + $0x34] sm:$0xf]
  %v96 = vld [vmem:[%s1 + $0x38] sm:$0xf]
  %v97 = vld [vmem:[%s1 + $0x3c] sm:$0xf]
  %v98 = vld [vmem:[%s3] sm:$0x1]
  %v99 = vlaneseq
  %v100 = vshrl.u32 %v99, 7
  %v101 = vsub.s32 0, %v100
  %v102 = vrot.slane %v98, %v101
  %v167 = vunpack.c.l.b16 %v18
  %v168 = vunpack.c.l.b16 %v19
  %v169 = vunpack.c.l.b16 %v20
  %v170 = vunpack.c.l.b16 %v21
  %v171 = vunpack.c.l.b16 %v22
  %v172 = vunpack.c.l.b16 %v23
  %v173 = vunpack.c.l.b16 %v24
  %v174 = vunpack.c.l.b16 %v25
  %v175 = vunpack.c.l.b16 %v26
  %v176 = vunpack.c.l.b16 %v27
  %v177 = vunpack.c.l.b16 %v28
  %v178 = vunpack.c.l.b16 %v29
  %v179 = vunpack.c.l.b16 %v30
  %v180 = vunpack.c.l.b16 %v31
  %v181 = vunpack.c.l.b16 %v32
  %v182 = vunpack.c.l.b16 %v33
  %v183 = vunpack.c.l.b16 %v34
  %v184 = vunpack.c.l.b16 %v35
  %v185 = vunpack.c.l.b16 %v36
  %v186 = vunpack.c.l.b16 %v37
  %v187 = vunpack.c.l.b16 %v38
  %v188 = vunpack.c.l.b16 %v39
  %v189 = vunpack.c.l.b16 %v40
  %v190 = vunpack.c.l.b16 %v41
  %v191 = vunpack.c.l.b16 %v42
  %v192 = vunpack.c.l.b16 %v43
  %v193 = vunpack.c.l.b16 %v44
  %v194 = vunpack.c.l.b16 %v45
  %v195 = vunpack.c.l.b16 %v46
  %v196 = vunpack.c.l.b16 %v47
  %v197 = vunpack.c.l.b16 %v48
  %v198 = vunpack.c.l.b16 %v49
  %v199 = vunpack.c.l.b16 %v50
  %v200 = vunpack.c.l.b16 %v51
  %v201 = vunpack.c.l.b16 %v52
  %v202 = vunpack.c.l.b16 %v53
  %v203 = vunpack.c.l.b16 %v54
  %v204 = vunpack.c.l.b16 %v55
  %v205 = vunpack.c.l.b16 %v56
  %v206 = vunpack.c.l.b16 %v57
  %v207 = vunpack.c.l.b16 %v58
  %v208 = vunpack.c.l.b16 %v59
  %v209 = vunpack.c.l.b16 %v60
  %v210 = vunpack.c.l.b16 %v61
  %v211 = vunpack.c.l.b16 %v62
  %v212 = vunpack.c.l.b16 %v63
  %v213 = vunpack.c.l.b16 %v64
  %v214 = vunpack.c.l.b16 %v65
  %v215 = vunpack.c.l.b16 %v66
  %v216 = vunpack.c.l.b16 %v67
  %v217 = vunpack.c.l.b16 %v68
  %v218 = vunpack.c.l.b16 %v69
  %v219 = vunpack.c.l.b16 %v70
  %v220 = vunpack.c.l.b16 %v71
  %v221 = vunpack.c.l.b16 %v72
  %v222 = vunpack.c.l.b16 %v73
  %v223 = vunpack.c.l.b16 %v74
  %v224 = vunpack.c.l.b16 %v75
  %v225 = vunpack.c.l.b16 %v76
  %v226 = vunpack.c.l.b16 %v77
  %v227 = vunpack.c.l.b16 %v78
  %v228 = vunpack.c.l.b16 %v79
  %v229 = vunpack.c.l.b16 %v80
  %v230 = vunpack.c.l.b16 %v81
  %v231 = vpack.c.b16 %v168, %v167
  %v232 = vpack.c.b16 %v170, %v169
  %v233 = vpack.c.b16 %v172, %v171
  %v234 = vpack.c.b16 %v174, %v173
  %v235 = vpack.c.b16 %v176, %v175
  %v236 = vpack.c.b16 %v178, %v177
  %v237 = vpack.c.b16 %v180, %v179
  %v238 = vpack.c.b16 %v182, %v181
  %v239 = vpack.c.b16 %v184, %v183
  %v240 = vpack.c.b16 %v186, %v185
  %v241 = vpack.c.b16 %v188, %v187
  %v242 = vpack.c.b16 %v190, %v189
  %v243 = vpack.c.b16 %v192, %v191
  %v244 = vpack.c.b16 %v194, %v193
  %v245 = vpack.c.b16 %v196, %v195
  %v246 = vpack.c.b16 %v198, %v197
  %v247 = vpack.c.b16 %v200, %v199
  %v248 = vpack.c.b16 %v202, %v201
  %v249 = vpack.c.b16 %v204, %v203
  %v250 = vpack.c.b16 %v206, %v205
  %v251 = vpack.c.b16 %v208, %v207
  %v252 = vpack.c.b16 %v210, %v209
  %v253 = vpack.c.b16 %v212, %v211
  %v254 = vpack.c.b16 %v214, %v213
  %v255 = vpack.c.b16 %v216, %v215
  %v256 = vpack.c.b16 %v218, %v217
  %v257 = vpack.c.b16 %v220, %v219
  %v258 = vpack.c.b16 %v222, %v221
  %v259 = vpack.c.b16 %v224, %v223
  %v260 = vpack.c.b16 %v226, %v225
  %v261 = vpack.c.b16 %v228, %v227
  %v262 = vpack.c.b16 %v230, %v229
  %v311 = vunpack.c.l.b16 %v82
  %v312 = vunpack.c.l.b16 %v83
  %v313 = vunpack.c.l.b16 %v84
  %v314 = vunpack.c.l.b16 %v85
  %v315 = vunpack.c.l.b16 %v86
  %v316 = vunpack.c.l.b16 %v87
  %v317 = vunpack.c.l.b16 %v88
  %v318 = vunpack.c.l.b16 %v89
  %v319 = vunpack.c.l.b16 %v90
  %v320 = vunpack.c.l.b16 %v91
  %v321 = vunpack.c.l.b16 %v92
  %v322 = vunpack.c.l.b16 %v93
  %v323 = vunpack.c.l.b16 %v94
  %v324 = vunpack.c.l.b16 %v95
  %v325 = vunpack.c.l.b16 %v96
  %v326 = vunpack.c.l.b16 %v97
  %v327 = vpack.c.b16 %v312, %v311
  %v328 = vpack.c.b16 %v314, %v313
  %v329 = vpack.c.b16 %v316, %v315
  %v330 = vpack.c.b16 %v318, %v317
  %v331 = vpack.c.b16 %v320, %v319
  %v332 = vpack.c.b16 %v322, %v321
  %v333 = vpack.c.b16 %v324, %v323
  %v334 = vpack.c.b16 %v326, %v325
  %343 = vmatprep.subr.bf16.mxu0 0
  %344 = vmatpush1.bf16.msra.mxu0 %v334
  %345 = vmatprep.subr.bf16.mxu0 0
  %346 = vmatpush1.bf16.msra.mxu0 %v333
  %347 = vmatprep.subr.bf16.mxu0 0
  %348 = vmatpush1.bf16.msra.mxu0 %v332
  %349 = vmatprep.subr.bf16.mxu0 0
  %350 = vmatpush1.bf16.msra.mxu0 %v331
  %351 = vmatprep.subr.bf16.mxu0 0
  %352 = vmatpush1.bf16.msra.mxu0 %v330
  %353 = vmatprep.subr.bf16.mxu0 0
  %354 = vmatpush1.bf16.msra.mxu0 %v329
  %355 = vmatprep.subr.bf16.mxu0 0
  %356 = vmatpush1.bf16.msra.mxu0 %v328
  %357 = vmatprep.subr.bf16.mxu0 0
  %358 = vmatpush1.bf16.msra.mxu0 %v327
  %359 = vmatprep.subr.bf16.mxu0 0
  %360 = vmatpush2.bf16.msra.mxu0 0
  %361 = vmatprep.subr.bf16.mxu0 0
  %362 = vmatpush2.bf16.msra.mxu0 0
  %363 = vmatprep.subr.bf16.mxu0 0
  %364 = vmatpush2.bf16.msra.mxu0 0
  %365 = vmatprep.subr.bf16.mxu0 0
  %366 = vmatpush2.bf16.msra.mxu0 0
  %367 = vmatprep.subr.bf16.mxu0 0
  %368 = vmatpush2.bf16.msra.mxu0 0
  %369 = vmatprep.subr.bf16.mxu0 0
  %370 = vmatpush2.bf16.msra.mxu0 0
  %371 = vmatprep.subr.bf16.mxu0 0
  %372 = vmatpush2.bf16.msra.mxu0 0
  %373 = vmatprep.subr.bf16.mxu0 0
  %374 = vmatpush2.bf16.msra.mxu0 0
  %375 = vmatprep.mubr.bf16.mxu0 0
  %376 = vmatmul.mubr.bf16.gmra.mxu0 %v231
  %v377 = vpop.f32.mrf.mxu0
  %v378 = vadd.f32 %v102, %v377
  %v379 = vpop.f32.mrf.mxu0
  %v380 = vpop.f32.mrf.mxu0
  %v381 = vadd.f32 %v102, %v380
  %v382 = vpop.f32.mrf.mxu0
  %383 = vmatprep.mubr.bf16.mxu0 0
  %384 = vmatmul.mubr.bf16.gmra.mxu0 %v232
  %v385 = vpop.f32.mrf.mxu0
  %v386 = vadd.f32 %v102, %v385
  %v387 = vpop.f32.mrf.mxu0
  %v388 = vpop.f32.mrf.mxu0
  %v389 = vadd.f32 %v102, %v388
  %v390 = vpop.f32.mrf.mxu0
  %391 = vmatprep.mubr.bf16.mxu0 0
  %392 = vmatmul.mubr.bf16.gmra.mxu0 %v233
  %v393 = vpop.f32.mrf.mxu0
  %v394 = vadd.f32 %v102, %v393
  %v395 = vpop.f32.mrf.mxu0
  %v396 = vpop.f32.mrf.mxu0
  %v397 = vadd.f32 %v102, %v396
  %v398 = vpop.f32.mrf.mxu0
  %399 = vmatprep.mubr.bf16.mxu0 0
  %400 = vmatmul.mubr.bf16.gmra.mxu0 %v234
  %v401 = vpop.f32.mrf.mxu0
  %v402 = vadd.f32 %v102, %v401
  %v403 = vpop.f32.mrf.mxu0
  %v404 = vpop.f32.mrf.mxu0
  %v405 = vadd.f32 %v102, %v404
  %v406 = vpop.f32.mrf.mxu0
  %407 = vmatprep.mubr.bf16.mxu0 0
  %408 = vmatmul.mubr.bf16.gmra.mxu0 %v235
  %v409 = vpop.f32.mrf.mxu0
  %v410 = vadd.f32 %v102, %v409
  %v411 = vpop.f32.mrf.mxu0
  %v412 = vpop.f32.mrf.mxu0
  %v413 = vadd.f32 %v102, %v412
  %v414 = vpop.f32.mrf.mxu0
  %415 = vmatprep.mubr.bf16.mxu0 0
  %416 = vmatmul.mubr.bf16.gmra.mxu0 %v236
  %v417 = vpop.f32.mrf.mxu0
  %v418 = vadd.f32 %v102, %v417
  %v419 = vpop.f32.mrf.mxu0
  %v420 = vpop.f32.mrf.mxu0
  %v421 = vadd.f32 %v102, %v420
  %v422 = vpop.f32.mrf.mxu0
  %423 = vmatprep.mubr.bf16.mxu0 0
  %424 = vmatmul.mubr.bf16.gmra.mxu0 %v237
  %v425 = vpop.f32.mrf.mxu0
  %v426 = vadd.f32 %v102, %v425
  %v427 = vpop.f32.mrf.mxu0
  %v428 = vpop.f32.mrf.mxu0
  %v429 = vadd.f32 %v102, %v428
  %v430 = vpop.f32.mrf.mxu0
  %431 = vmatprep.mubr.bf16.mxu0 0
  %432 = vmatmul.mubr.bf16.gmra.mxu0 %v238
  %v433 = vpop.f32.mrf.mxu0
  %v434 = vadd.f32 %v102, %v433
  %v435 = vpop.f32.mrf.mxu0
  %v436 = vpop.f32.mrf.mxu0
  %v437 = vadd.f32 %v102, %v436
  %v438 = vpop.f32.mrf.mxu0
  %439 = vmatprep.mubr.bf16.mxu0 0
  %440 = vmatmul.mubr.bf16.gmra.mxu0 %v239
  %v441 = vpop.f32.mrf.mxu0
  %v442 = vadd.f32 %v102, %v441
  %v443 = vpop.f32.mrf.mxu0
  %v444 = vpop.f32.mrf.mxu0
  %v445 = vadd.f32 %v102, %v444
  %v446 = vpop.f32.mrf.mxu0
  %447 = vmatprep.mubr.bf16.mxu0 0
  %448 = vmatmul.mubr.bf16.gmra.mxu0 %v240
  %v449 = vpop.f32.mrf.mxu0
  %v450 = vadd.f32 %v102, %v449
  %v451 = vpop.f32.mrf.mxu0
  %v452 = vpop.f32.mrf.mxu0
  %v453 = vadd.f32 %v102, %v452
  %v454 = vpop.f32.mrf.mxu0
  %455 = vmatprep.mubr.bf16.mxu0 0
  %456 = vmatmul.mubr.bf16.gmra.mxu0 %v241
  %v457 = vpop.f32.mrf.mxu0
  %v458 = vadd.f32 %v102, %v457
  %v459 = vpop.f32.mrf.mxu0
  %v460 = vpop.f32.mrf.mxu0
  %v461 = vadd.f32 %v102, %v460
  %v462 = vpop.f32.mrf.mxu0
  %463 = vmatprep.mubr.bf16.mxu0 0
  %464 = vmatmul.mubr.bf16.gmra.mxu0 %v242
  %v465 = vpop.f32.mrf.mxu0
  %v466 = vadd.f32 %v102, %v465
  %v467 = vpop.f32.mrf.mxu0
  %v468 = vpop.f32.mrf.mxu0
  %v469 = vadd.f32 %v102, %v468
  %v470 = vpop.f32.mrf.mxu0
  %471 = vmatprep.mubr.bf16.mxu0 0
  %472 = vmatmul.mubr.bf16.gmra.mxu0 %v243
  %v473 = vpop.f32.mrf.mxu0
  %v474 = vadd.f32 %v102, %v473
  %v475 = vpop.f32.mrf.mxu0
  %v476 = vpop.f32.mrf.mxu0
  %v477 = vadd.f32 %v102, %v476
  %v478 = vpop.f32.mrf.mxu0
  %479 = vmatprep.mubr.bf16.mxu0 0
  %480 = vmatmul.mubr.bf16.gmra.mxu0 %v244
  %v481 = vpop.f32.mrf.mxu0
  %v482 = vadd.f32 %v102, %v481
  %v483 = vpop.f32.mrf.mxu0
  %v484 = vpop.f32.mrf.mxu0
  %v485 = vadd.f32 %v102, %v484
  %v486 = vpop.f32.mrf.mxu0
  %487 = vmatprep.mubr.bf16.mxu0 0
  %488 = vmatmul.mubr.bf16.gmra.mxu0 %v245
  %v489 = vpop.f32.mrf.mxu0
  %v490 = vadd.f32 %v102, %v489
  %v491 = vpop.f32.mrf.mxu0
  %v492 = vpop.f32.mrf.mxu0
  %v493 = vadd.f32 %v102, %v492
  %v494 = vpop.f32.mrf.mxu0
  %495 = vmatprep.mubr.bf16.mxu0 0
  %496 = vmatmul.mubr.bf16.gmra.mxu0 %v246
  %v497 = vpop.f32.mrf.mxu0
  %v498 = vadd.f32 %v102, %v497
  %v499 = vpop.f32.mrf.mxu0
  %v500 = vpop.f32.mrf.mxu0
  %v501 = vadd.f32 %v102, %v500
  %v502 = vpop.f32.mrf.mxu0
  %503 = vmatprep.mubr.bf16.mxu0 0
  %504 = vmatmul.mubr.bf16.gmra.mxu0 %v247
  %v505 = vpop.f32.mrf.mxu0
  %v506 = vadd.f32 %v102, %v505
  %v507 = vpop.f32.mrf.mxu0
  %v508 = vpop.f32.mrf.mxu0
  %v509 = vadd.f32 %v102, %v508
  %v510 = vpop.f32.mrf.mxu0
  %511 = vmatprep.mubr.bf16.mxu0 0
  %512 = vmatmul.mubr.bf16.gmra.mxu0 %v248
  %v513 = vpop.f32.mrf.mxu0
  %v514 = vadd.f32 %v102, %v513
  %v515 = vpop.f32.mrf.mxu0
  %v516 = vpop.f32.mrf.mxu0
  %v517 = vadd.f32 %v102, %v516
  %v518 = vpop.f32.mrf.mxu0
  %519 = vmatprep.mubr.bf16.mxu0 0
  %520 = vmatmul.mubr.bf16.gmra.mxu0 %v249
  %v521 = vpop.f32.mrf.mxu0
  %v522 = vadd.f32 %v102, %v521
  %v523 = vpop.f32.mrf.mxu0
  %v524 = vpop.f32.mrf.mxu0
  %v525 = vadd.f32 %v102, %v524
  %v526 = vpop.f32.mrf.mxu0
  %527 = vmatprep.mubr.bf16.mxu0 0
  %528 = vmatmul.mubr.bf16.gmra.mxu0 %v250
  %v529 = vpop.f32.mrf.mxu0
  %v530 = vadd.f32 %v102, %v529
  %v531 = vpop.f32.mrf.mxu0
  %v532 = vpop.f32.mrf.mxu0
  %v533 = vadd.f32 %v102, %v532
  %v534 = vpop.f32.mrf.mxu0
  %535 = vmatprep.mubr.bf16.mxu0 0
  %536 = vmatmul.mubr.bf16.gmra.mxu0 %v251
  %v537 = vpop.f32.mrf.mxu0
  %v538 = vadd.f32 %v102, %v537
  %v539 = vpop.f32.mrf.mxu0
  %v540 = vpop.f32.mrf.mxu0
  %v541 = vadd.f32 %v102, %v540
  %v542 = vpop.f32.mrf.mxu0
  %543 = vmatprep.mubr.bf16.mxu0 0
  %544 = vmatmul.mubr.bf16.gmra.mxu0 %v252
  %v545 = vpop.f32.mrf.mxu0
  %v546 = vadd.f32 %v102, %v545
  %v547 = vpop.f32.mrf.mxu0
  %v548 = vpop.f32.mrf.mxu0
  %v549 = vadd.f32 %v102, %v548
  %v550 = vpop.f32.mrf.mxu0
  %551 = vmatprep.mubr.bf16.mxu0 0
  %552 = vmatmul.mubr.bf16.gmra.mxu0 %v253
  %v553 = vpop.f32.mrf.mxu0
  %v554 = vadd.f32 %v102, %v553
  %v555 = vpop.f32.mrf.mxu0
  %v556 = vpop.f32.mrf.mxu0
  %v557 = vadd.f32 %v102, %v556
  %v558 = vpop.f32.mrf.mxu0
  %559 = vmatprep.mubr.bf16.mxu0 0
  %560 = vmatmul.mubr.bf16.gmra.mxu0 %v254
  %v561 = vpop.f32.mrf.mxu0
  %v562 = vadd.f32 %v102, %v561
  %v563 = vpop.f32.mrf.mxu0
  %v564 = vpop.f32.mrf.mxu0
  %v565 = vadd.f32 %v102, %v564
  %v566 = vpop.f32.mrf.mxu0
  %567 = vmatprep.mubr.bf16.mxu0 0
  %568 = vmatmul.mubr.bf16.gmra.mxu0 %v255
  %v569 = vpop.f32.mrf.mxu0
  %v570 = vadd.f32 %v102, %v569
  %v571 = vpop.f32.mrf.mxu0
  %v572 = vpop.f32.mrf.mxu0
  %v573 = vadd.f32 %v102, %v572
  %v574 = vpop.f32.mrf.mxu0
  %575 = vmatprep.mubr.bf16.mxu0 0
  %576 = vmatmul.mubr.bf16.gmra.mxu0 %v256
  %v577 = vpop.f32.mrf.mxu0
  %v578 = vadd.f32 %v102, %v577
  %v579 = vpop.f32.mrf.mxu0
  %v580 = vpop.f32.mrf.mxu0
  %v581 = vadd.f32 %v102, %v580
  %v582 = vpop.f32.mrf.mxu0
  %583 = vmatprep.mubr.bf16.mxu0 0
  %584 = vmatmul.mubr.bf16.gmra.mxu0 %v257
  %v585 = vpop.f32.mrf.mxu0
  %v586 = vadd.f32 %v102, %v585
  %v587 = vpop.f32.mrf.mxu0
  %v588 = vpop.f32.mrf.mxu0
  %v589 = vadd.f32 %v102, %v588
  %v590 = vpop.f32.mrf.mxu0
  %591 = vmatprep.mubr.bf16.mxu0 0
  %592 = vmatmul.mubr.bf16.gmra.mxu0 %v258
  %v593 = vpop.f32.mrf.mxu0
  %v594 = vadd.f32 %v102, %v593
  %v595 = vpop.f32.mrf.mxu0
  %v596 = vpop.f32.mrf.mxu0
  %v597 = vadd.f32 %v102, %v596
  %v598 = vpop.f32.mrf.mxu0
  %599 = vmatprep.mubr.bf16.mxu0 0
  %600 = vmatmul.mubr.bf16.gmra.mxu0 %v259
  %v601 = vpop.f32.mrf.mxu0
  %v602 = vadd.f32 %v102, %v601
  %v603 = vpop.f32.mrf.mxu0
  %v604 = vpop.f32.mrf.mxu0
  %v605 = vadd.f32 %v102, %v604
  %v606 = vpop.f32.mrf.mxu0
  %607 = vmatprep.mubr.bf16.mxu0 0
  %608 = vmatmul.mubr.bf16.gmra.mxu0 %v260
  %v609 = vpop.f32.mrf.mxu0
  %v610 = vadd.f32 %v102, %v609
  %v611 = vpop.f32.mrf.mxu0
  %v612 = vpop.f32.mrf.mxu0
  %v613 = vadd.f32 %v102, %v612
  %v614 = vpop.f32.mrf.mxu0
  %615 = vmatprep.mubr.bf16.mxu0 0
  %616 = vmatmul.mubr.bf16.gmra.mxu0 %v261
  %v617 = vpop.f32.mrf.mxu0
  %v618 = vadd.f32 %v102, %v617
  %v619 = vpop.f32.mrf.mxu0
  %v620 = vpop.f32.mrf.mxu0
  %v621 = vadd.f32 %v102, %v620
  %v622 = vpop.f32.mrf.mxu0
  %623 = vmatprep.mubr.bf16.mxu0 0
  %624 = vmatmul.mubr.bf16.gmra.mxu0 %v262
  %v625 = vpop.f32.mrf.mxu0
  %v626 = vadd.f32 %v102, %v625
  %v627 = vpop.f32.mrf.mxu0
  %v628 = vpop.f32.mrf.mxu0
  %v629 = vadd.f32 %v102, %v628
  %v630 = vpop.f32.mrf.mxu0
  %631 = vdwg.mxu0
  %v632 = vmax.f32 %v378, 0.0
  %v633 = vmax.f32 %v381, 0.0
  %v634 = vmax.f32 %v386, 0.0
  %v635 = vmax.f32 %v389, 0.0
  %v636 = vmax.f32 %v394, 0.0
  %v637 = vmax.f32 %v397, 0.0
  %v638 = vmax.f32 %v402, 0.0
  %v639 = vmax.f32 %v405, 0.0
  %v640 = vmax.f32 %v410, 0.0
  %v641 = vmax.f32 %v413, 0.0
  %v642 = vmax.f32 %v418, 0.0
  %v643 = vmax.f32 %v421, 0.0
  %v644 = vmax.f32 %v426, 0.0
  %v645 = vmax.f32 %v429, 0.0
  %v646 = vmax.f32 %v434, 0.0
  %v647 = vmax.f32 %v437, 0.0
  %v648 = vmax.f32 %v442, 0.0
  %v649 = vmax.f32 %v445, 0.0
  %v650 = vmax.f32 %v450, 0.0
  %v651 = vmax.f32 %v453, 0.0
  %v652 = vmax.f32 %v458, 0.0
  %v653 = vmax.f32 %v461, 0.0
  %v654 = vmax.f32 %v466, 0.0
  %v655 = vmax.f32 %v469, 0.0
  %v656 = vmax.f32 %v474, 0.0
  %v657 = vmax.f32 %v477, 0.0
  %v658 = vmax.f32 %v482, 0.0
  %v659 = vmax.f32 %v485, 0.0
  %v660 = vmax.f32 %v490, 0.0
  %v661 = vmax.f32 %v493, 0.0
  %v662 = vmax.f32 %v498, 0.0
  %v663 = vmax.f32 %v501, 0.0
  %v664 = vmax.f32 %v506, 0.0
  %v665 = vmax.f32 %v509, 0.0
  %v666 = vmax.f32 %v514, 0.0
  %v667 = vmax.f32 %v517, 0.0
  %v668 = vmax.f32 %v522, 0.0
  %v669 = vmax.f32 %v525, 0.0
  %v670 = vmax.f32 %v530, 0.0
  %v671 = vmax.f32 %v533, 0.0
  %v672 = vmax.f32 %v538, 0.0
  %v673 = vmax.f32 %v541, 0.0
  %v674 = vmax.f32 %v546, 0.0
  %v675 = vmax.f32 %v549, 0.0
  %v676 = vmax.f32 %v554, 0.0
  %v677 = vmax.f32 %v557, 0.0
  %v678 = vmax.f32 %v562, 0.0
  %v679 = vmax.f32 %v565, 0.0
  %v680 = vmax.f32 %v570, 0.0
  %v681 = vmax.f32 %v573, 0.0
  %v682 = vmax.f32 %v578, 0.0
  %v683 = vmax.f32 %v581, 0.0
  %v684 = vmax.f32 %v586, 0.0
  %v685 = vmax.f32 %v589, 0.0
  %v686 = vmax.f32 %v594, 0.0
  %v687 = vmax.f32 %v597, 0.0
  %v688 = vmax.f32 %v602, 0.0
  %v689 = vmax.f32 %v605, 0.0
  %v690 = vmax.f32 %v610, 0.0
  %v691 = vmax.f32 %v613, 0.0
  %v692 = vmax.f32 %v618, 0.0
  %v693 = vmax.f32 %v621, 0.0
  %v694 = vmax.f32 %v626, 0.0
  %v695 = vmax.f32 %v629, 0.0
  %v696 = vlaneseq
  %v697 = vshrl.u32 %v696, 7
  %v698 = vlaneseq
  %v699 = vand.u32 %v698, 127
  %v700 = vadd.s32 %v699, 128
  %v701 = vadd.s32 %v699, 256
  %v702 = vadd.s32 %v699, 384
  %v703 = vmul.u32 %v697, 256
  %vm704 = vcmp.ge.s32.totalorder %v699, %v703
  %vm705 = vcmp.ge.s32.totalorder %v700, %v703
  %vm706 = vcmp.ge.s32.totalorder %v701, %v703
  %vm707 = vcmp.ge.s32.totalorder %v702, %v703
  %v708 = vadd.s32 %v697, 1
  %v709 = vmul.u32 %v708, 256
  %vm710 = vcmp.lt.s32.totalorder %v699, %v709
  %vm711 = vcmp.lt.s32.totalorder %v700, %v709
  %vm712 = vcmp.lt.s32.totalorder %v701, %v709
  %vm713 = vcmp.lt.s32.totalorder %v702, %v709
  %vm714 = vmand %vm704, %vm710
  %vm715 = vmand %vm705, %vm711
  %vm716 = vmand %vm706, %vm712
  %vm717 = vmand %vm707, %vm713
  %v718 = vsel %vm714, 0.00390625, 0.0
  %v719 = vsel %vm715, 0.00390625, 0.0
  %v720 = vsel %vm716, 0.00390625, 0.0
  %v721 = vsel %vm717, 0.00390625, 0.0
  %722 = vmatprep.subr.mxu0 0.0
  %723 = vmatpush1.msra.mxu0 %v647
  %724 = vmatprep.subr.mxu0 0.0
  %725 = vmatpush1.msra.mxu0 %v646
  %726 = vmatprep.subr.mxu0 0.0
  %727 = vmatpush1.msra.mxu0 %v645
  %728 = vmatprep.subr.mxu0 0.0
  %729 = vmatpush1.msra.mxu0 %v644
  %730 = vmatprep.subr.mxu0 0.0
  %731 = vmatpush1.msra.mxu0 %v643
  %732 = vmatprep.subr.mxu0 0.0
  %733 = vmatpush1.msra.mxu0 %v642
  %734 = vmatprep.subr.mxu0 0.0
  %735 = vmatpush1.msra.mxu0 %v641
  %736 = vmatprep.subr.mxu0 0.0
  %737 = vmatpush1.msra.mxu0 %v640
  %738 = vmatprep.subr.mxu0 0.0
  %739 = vmatpush1.msra.mxu0 %v639
  %740 = vmatprep.subr.mxu0 0.0
  %741 = vmatpush1.msra.mxu0 %v638
  %742 = vmatprep.subr.mxu0 0.0
  %743 = vmatpush1.msra.mxu0 %v637
  %744 = vmatprep.subr.mxu0 0.0
  %745 = vmatpush1.msra.mxu0 %v636
  %746 = vmatprep.subr.mxu0 0.0
  %747 = vmatpush1.msra.mxu0 %v635
  %748 = vmatprep.subr.mxu0 0.0
  %749 = vmatpush1.msra.mxu0 %v634
  %750 = vmatprep.subr.mxu0 0.0
  %751 = vmatpush1.msra.mxu0 %v633
  %752 = vmatprep.subr.mxu0 0.0
  %753 = vmatpush1.msra.mxu0 %v632
  %754 = vmatprep.subr.mxu0 0.0
  %755 = vmatpush2.msra.mxu0 %v663
  %756 = vmatprep.subr.mxu0 0.0
  %757 = vmatpush2.msra.mxu0 %v662
  %758 = vmatprep.subr.mxu0 0.0
  %759 = vmatpush2.msra.mxu0 %v661
  %760 = vmatprep.subr.mxu0 0.0
  %761 = vmatpush2.msra.mxu0 %v660
  %762 = vmatprep.subr.mxu0 0.0
  %763 = vmatpush2.msra.mxu0 %v659
  %764 = vmatprep.subr.mxu0 0.0
  %765 = vmatpush2.msra.mxu0 %v658
  %766 = vmatprep.subr.mxu0 0.0
  %767 = vmatpush2.msra.mxu0 %v657
  %768 = vmatprep.subr.mxu0 0.0
  %769 = vmatpush2.msra.mxu0 %v656
  %770 = vmatprep.subr.mxu0 0.0
  %771 = vmatpush2.msra.mxu0 %v655
  %772 = vmatprep.subr.mxu0 0.0
  %773 = vmatpush2.msra.mxu0 %v654
  %774 = vmatprep.subr.mxu0 0.0
  %775 = vmatpush2.msra.mxu0 %v653
  %776 = vmatprep.subr.mxu0 0.0
  %777 = vmatpush2.msra.mxu0 %v652
  %778 = vmatprep.subr.mxu0 0.0
  %779 = vmatpush2.msra.mxu0 %v651
  %780 = vmatprep.subr.mxu0 0.0
  %781 = vmatpush2.msra.mxu0 %v650
  %782 = vmatprep.subr.mxu0 0.0
  %783 = vmatpush2.msra.mxu0 %v649
  %784 = vmatprep.subr.mxu0 0.0
  %785 = vmatpush2.msra.mxu0 %v648
  %786 = vmatprep.mubr.f32.mxu0 %v719
  %787 = vmatmul.mubr.f32.gmra.mxu0 %v718
  %v788 = vpop.f32.mrf.mxu0
  %v789 = vadd.f32 0.0, %v788
  %v790 = vpop.f32.mrf.mxu0
  %791 = vdwg.mxu0
  %792 = vmatprep.subr.mxu0 0.0
  %793 = vmatpush1.msra.mxu0 %v679
  %794 = vmatprep.subr.mxu0 0.0
  %795 = vmatpush1.msra.mxu0 %v678
  %796 = vmatprep.subr.mxu0 0.0
  %797 = vmatpush1.msra.mxu0 %v677
  %798 = vmatprep.subr.mxu0 0.0
  %799 = vmatpush1.msra.mxu0 %v676
  %800 = vmatprep.subr.mxu0 0.0
  %801 = vmatpush1.msra.mxu0 %v675
  %802 = vmatprep.subr.mxu0 0.0
  %803 = vmatpush1.msra.mxu0 %v674
  %804 = vmatprep.subr.mxu0 0.0
  %805 = vmatpush1.msra.mxu0 %v673
  %806 = vmatprep.subr.mxu0 0.0
  %807 = vmatpush1.msra.mxu0 %v672
  %808 = vmatprep.subr.mxu0 0.0
  %809 = vmatpush1.msra.mxu0 %v671
  %810 = vmatprep.subr.mxu0 0.0
  %811 = vmatpush1.msra.mxu0 %v670
  %812 = vmatprep.subr.mxu0 0.0
  %813 = vmatpush1.msra.mxu0 %v669
  %814 = vmatprep.subr.mxu0 0.0
  %815 = vmatpush1.msra.mxu0 %v668
  %816 = vmatprep.subr.mxu0 0.0
  %817 = vmatpush1.msra.mxu0 %v667
  %818 = vmatprep.subr.mxu0 0.0
  %819 = vmatpush1.msra.mxu0 %v666
  %820 = vmatprep.subr.mxu0 0.0
  %821 = vmatpush1.msra.mxu0 %v665
  %822 = vmatprep.subr.mxu0 0.0
  %823 = vmatpush1.msra.mxu0 %v664
  %824 = vmatprep.subr.mxu0 0.0
  %825 = vmatpush2.msra.mxu0 %v695
  %826 = vmatprep.subr.mxu0 0.0
  %827 = vmatpush2.msra.mxu0 %v694
  %828 = vmatprep.subr.mxu0 0.0
  %829 = vmatpush2.msra.mxu0 %v693
  %830 = vmatprep.subr.mxu0 0.0
  %831 = vmatpush2.msra.mxu0 %v692
  %832 = vmatprep.subr.mxu0 0.0
  %833 = vmatpush2.msra.mxu0 %v691
  %834 = vmatprep.subr.mxu0 0.0
  %835 = vmatpush2.msra.mxu0 %v690
  %836 = vmatprep.subr.mxu0 0.0
  %837 = vmatpush2.msra.mxu0 %v689
  %838 = vmatprep.subr.mxu0 0.0
  %839 = vmatpush2.msra.mxu0 %v688
  %840 = vmatprep.subr.mxu0 0.0
  %841 = vmatpush2.msra.mxu0 %v687
  %842 = vmatprep.subr.mxu0 0.0
  %843 = vmatpush2.msra.mxu0 %v686
  %844 = vmatprep.subr.mxu0 0.0
  %845 = vmatpush2.msra.mxu0 %v685
  %846 = vmatprep.subr.mxu0 0.0
  %847 = vmatpush2.msra.mxu0 %v684
  %848 = vmatprep.subr.mxu0 0.0
  %849 = vmatpush2.msra.mxu0 %v683
  %850 = vmatprep.subr.mxu0 0.0
  %851 = vmatpush2.msra.mxu0 %v682
  %852 = vmatprep.subr.mxu0 0.0
  %853 = vmatpush2.msra.mxu0 %v681
  %854 = vmatprep.subr.mxu0 0.0
  %855 = vmatpush2.msra.mxu0 %v680
  %856 = vmatprep.mubr.f32.mxu0 %v721
  %857 = vmatmul.mubr.f32.gmra.mxu0 %v720
  %v858 = vpop.f32.mrf.mxu0
  %v859 = vadd.f32 %v789, %v858
  %v860 = vpop.f32.mrf.mxu0
  %861 = vdwg.mxu0
  %v862 = vld [vmem:[%s2] sm:$0xff]
  %v863 = vld [vmem:[%s2 + $0x8] sm:$0xff]
  %v864 = vld [vmem:[%s2 + $0x10] sm:$0xff]
  %v865 = vld [vmem:[%s2 + $0x18] sm:$0xff]
  %v866 = vld [vmem:[%s3 + $0x1] sm:$0x1]
  %v867 = vlaneseq
  %v868 = vshrl.u32 %v867, 7
  %v869 = vsub.s32 0, %v868
  %v870 = vrot.slane %v866, %v869
  %vm871 = vcmask 261120
  %v873 = vsel %vm871, %v859, 0
  %875 = vmatprep.subr.mxu0 0.0
  %876 = vmatpush1.msra.mxu0 0.0
  %877 = vmatprep.subr.mxu0 0.0
  %878 = vmatpush1.msra.mxu0 0.0
  %879 = vmatprep.subr.mxu0 0.0
  %880 = vmatpush1.msra.mxu0 0.0
  %881 = vmatprep.subr.mxu0 0.0
  %882 = vmatpush1.msra.mxu0 0.0
  %883 = vmatprep.subr.mxu0 0.0
  %884 = vmatpush1.msra.mxu0 0.0
  %885 = vmatprep.subr.mxu0 0.0
  %886 = vmatpush1.msra.mxu0 0.0
  %887 = vmatprep.subr.mxu0 0.0
  %888 = vmatpush1.msra.mxu0 0.0
  %889 = vmatprep.subr.mxu0 0.0
  %890 = vmatpush1.msra.mxu0 0.0
  %891 = vmatprep.subr.mxu0 0.0
  %892 = vmatpush1.msra.mxu0 0.0
  %893 = vmatprep.subr.mxu0 0.0
  %894 = vmatpush1.msra.mxu0 0.0
  %895 = vmatprep.subr.mxu0 0.0
  %896 = vmatpush1.msra.mxu0 0.0
  %897 = vmatprep.subr.mxu0 0.0
  %898 = vmatpush1.msra.mxu0 0.0
  %899 = vmatprep.subr.mxu0 0.0
  %900 = vmatpush1.msra.mxu0 %v865
  %901 = vmatprep.subr.mxu0 0.0
  %902 = vmatpush1.msra.mxu0 %v864
  %903 = vmatprep.subr.mxu0 0.0
  %904 = vmatpush1.msra.mxu0 %v863
  %905 = vmatprep.subr.mxu0 0.0
  %906 = vmatpush1.msra.mxu0 %v862
  %907 = vmatprep.subr.mxu0 0.0
  %908 = vmatpush2.msra.mxu0 0.0
  %909 = vmatprep.subr.mxu0 0.0
  %910 = vmatpush2.msra.mxu0 0.0
  %911 = vmatprep.subr.mxu0 0.0
  %912 = vmatpush2.msra.mxu0 0.0
  %913 = vmatprep.subr.mxu0 0.0
  %914 = vmatpush2.msra.mxu0 0.0
  %915 = vmatprep.subr.mxu0 0.0
  %916 = vmatpush2.msra.mxu0 0.0
  %917 = vmatprep.subr.mxu0 0.0
  %918 = vmatpush2.msra.mxu0 0.0
  %919 = vmatprep.subr.mxu0 0.0
  %920 = vmatpush2.msra.mxu0 0.0
  %921 = vmatprep.subr.mxu0 0.0
  %922 = vmatpush2.msra.mxu0 0.0
  %923 = vmatprep.subr.mxu0 0.0
  %924 = vmatpush2.msra.mxu0 0.0
  %925 = vmatprep.subr.mxu0 0.0
  %926 = vmatpush2.msra.mxu0 0.0
  %927 = vmatprep.subr.mxu0 0.0
  %928 = vmatpush2.msra.mxu0 0.0
  %929 = vmatprep.subr.mxu0 0.0
  %930 = vmatpush2.msra.mxu0 0.0
  %931 = vmatprep.subr.mxu0 0.0
  %932 = vmatpush2.msra.mxu0 0.0
  %933 = vmatprep.subr.mxu0 0.0
  %934 = vmatpush2.msra.mxu0 0.0
  %935 = vmatprep.subr.mxu0 0.0
  %936 = vmatpush2.msra.mxu0 0.0
  %937 = vmatprep.subr.mxu0 0.0
  %938 = vmatpush2.msra.mxu0 0.0
  %939 = vmatprep.mubr.f32.mxu0 0.0
  %940 = vmatmul.mubr.f32.gmra.mxu0 %v873
  %v941 = vpop.f32.mrf.mxu0
  %v942 = vadd.f32 %v870, %v941
  %v943 = vpop.f32.mrf.mxu0
  %944 = vdwg.mxu0
  %v945 = vld [vmem:[%s2 + $0x20] sm:$0xff]
  %v946 = vld [vmem:[%s2 + $0x28] sm:$0xff]
  %v947 = vld [vmem:[%s2 + $0x30] sm:$0xff]
  %v948 = vld [vmem:[%s2 + $0x38] sm:$0xff]
  %v949 = vld [vmem:[%s3 + $0x2] sm:$0x1]
  %v950 = vlaneseq
  %v951 = vshrl.u32 %v950, 7
  %v952 = vsub.s32 0, %v951
  %v953 = vrot.slane %v949, %v952
  %v955 = vsel %vm871, %v942, 0
  %957 = vmatprep.subr.mxu0 0.0
  %958 = vmatpush1.msra.mxu0 0.0
  %959 = vmatprep.subr.mxu0 0.0
  %960 = vmatpush1.msra.mxu0 0.0
  %961 = vmatprep.subr.mxu0 0.0
  %962 = vmatpush1.msra.mxu0 0.0
  %963 = vmatprep.subr.mxu0 0.0
  %964 = vmatpush1.msra.mxu0 0.0
  %965 = vmatprep.subr.mxu0 0.0
  %966 = vmatpush1.msra.mxu0 0.0
  %967 = vmatprep.subr.mxu0 0.0
  %968 = vmatpush1.msra.mxu0 0.0
  %969 = vmatprep.subr.mxu0 0.0
  %970 = vmatpush1.msra.mxu0 0.0
  %971 = vmatprep.subr.mxu0 0.0
  %972 = vmatpush1.msra.mxu0 0.0
  %973 = vmatprep.subr.mxu0 0.0
  %974 = vmatpush1.msra.mxu0 0.0
  %975 = vmatprep.subr.mxu0 0.0
  %976 = vmatpush1.msra.mxu0 0.0
  %977 = vmatprep.subr.mxu0 0.0
  %978 = vmatpush1.msra.mxu0 0.0
  %979 = vmatprep.subr.mxu0 0.0
  %980 = vmatpush1.msra.mxu0 0.0
  %981 = vmatprep.subr.mxu0 0.0
  %982 = vmatpush1.msra.mxu0 %v948
  %983 = vmatprep.subr.mxu0 0.0
  %984 = vmatpush1.msra.mxu0 %v947
  %985 = vmatprep.subr.mxu0 0.0
  %986 = vmatpush1.msra.mxu0 %v946
  %987 = vmatprep.subr.mxu0 0.0
  %988 = vmatpush1.msra.mxu0 %v945
  %989 = vmatprep.subr.mxu0 0.0
  %990 = vmatpush2.msra.mxu0 0.0
  %991 = vmatprep.subr.mxu0 0.0
  %992 = vmatpush2.msra.mxu0 0.0
  %993 = vmatprep.subr.mxu0 0.0
  %994 = vmatpush2.msra.mxu0 0.0
  %995 = vmatprep.subr.mxu0 0.0
  %996 = vmatpush2.msra.mxu0 0.0
  %997 = vmatprep.subr.mxu0 0.0
  %998 = vmatpush2.msra.mxu0 0.0
  %999 = vmatprep.subr.mxu0 0.0
  %1000 = vmatpush2.msra.mxu0 0.0
  %1001 = vmatprep.subr.mxu0 0.0
  %1002 = vmatpush2.msra.mxu0 0.0
  %1003 = vmatprep.subr.mxu0 0.0
  %1004 = vmatpush2.msra.mxu0 0.0
  %1005 = vmatprep.subr.mxu0 0.0
  %1006 = vmatpush2.msra.mxu0 0.0
  %1007 = vmatprep.subr.mxu0 0.0
  %1008 = vmatpush2.msra.mxu0 0.0
  %1009 = vmatprep.subr.mxu0 0.0
  %1010 = vmatpush2.msra.mxu0 0.0
  %1011 = vmatprep.subr.mxu0 0.0
  %1012 = vmatpush2.msra.mxu0 0.0
  %1013 = vmatprep.subr.mxu0 0.0
  %1014 = vmatpush2.msra.mxu0 0.0
  %1015 = vmatprep.subr.mxu0 0.0
  %1016 = vmatpush2.msra.mxu0 0.0
  %1017 = vmatprep.subr.mxu0 0.0
  %1018 = vmatpush2.msra.mxu0 0.0
  %1019 = vmatprep.subr.mxu0 0.0
  %1020 = vmatpush2.msra.mxu0 0.0
  %1021 = vmatprep.mubr.f32.mxu0 0.0
  %1022 = vmatmul.mubr.f32.gmra.mxu0 %v955
  %v1023 = vpop.f32.mrf.mxu0
  %v1024 = vadd.f32 %v953, %v1023
  %v1025 = vpop.f32.mrf.mxu0
  %1026 = vdwg.mxu0
  %vm1027 = vcmask 17408
  %v1028 = vsel %vm1027, %v1024, -inf
  %1029 = vmax.xlane.f32.xlu0 %v1028
  %v1030 = vpop.xlane.xlu0 %1029
  %v1031 = vsub.f32 %v1024, %v1030
  %v1032 = vmul.f32 %v1031, 1.442695
  %v1033 = vpow.pop %v1032
  %v1034 = vsel %vm1027, %v1033, 0.0
  %1035 = vadd.xlane.f32.xlu0 %v1034
  %v1036 = vpop.xlane.xlu0 %1035
  %v1037 = vrcp.pop %v1036
  %v1038 = vmul.f32 %v1033, %v1037
  %v1039 = vld [vmem:[%s2 + $0x40] sm:$0xff]
  %v1040 = vld [vmem:[%s2 + $0x48] sm:$0xff]
  %v1041 = vld [vmem:[%s2 + $0x50] sm:$0xff]
  %v1042 = vld [vmem:[%s2 + $0x58] sm:$0xff]
  %v1043 = vld [vmem:[%s3 + $0x3] sm:$0x1]
  %v1044 = vlaneseq
  %v1045 = vshrl.u32 %v1044, 7
  %v1046 = vsub.s32 0, %v1045
  %v1047 = vrot.slane %v1043, %v1046
  %1048 = vmatprep.subr.mxu0 0.0
  %1049 = vmatpush1.msra.mxu0 0.0
  %1050 = vmatprep.subr.mxu0 0.0
  %1051 = vmatpush1.msra.mxu0 0.0
  %1052 = vmatprep.subr.mxu0 0.0
  %1053 = vmatpush1.msra.mxu0 0.0
  %1054 = vmatprep.subr.mxu0 0.0
  %1055 = vmatpush1.msra.mxu0 0.0
  %1056 = vmatprep.subr.mxu0 0.0
  %1057 = vmatpush1.msra.mxu0 0.0
  %1058 = vmatprep.subr.mxu0 0.0
  %1059 = vmatpush1.msra.mxu0 0.0
  %1060 = vmatprep.subr.mxu0 0.0
  %1061 = vmatpush1.msra.mxu0 0.0
  %1062 = vmatprep.subr.mxu0 0.0
  %1063 = vmatpush1.msra.mxu0 0.0
  %1064 = vmatprep.subr.mxu0 0.0
  %1065 = vmatpush1.msra.mxu0 0.0
  %1066 = vmatprep.subr.mxu0 0.0
  %1067 = vmatpush1.msra.mxu0 0.0
  %1068 = vmatprep.subr.mxu0 0.0
  %1069 = vmatpush1.msra.mxu0 0.0
  %1070 = vmatprep.subr.mxu0 0.0
  %1071 = vmatpush1.msra.mxu0 0.0
  %1072 = vmatprep.subr.mxu0 0.0
  %1073 = vmatpush1.msra.mxu0 %v1042
  %1074 = vmatprep.subr.mxu0 0.0
  %1075 = vmatpush1.msra.mxu0 %v1041
  %1076 = vmatprep.subr.mxu0 0.0
  %1077 = vmatpush1.msra.mxu0 %v1040
  %1078 = vmatprep.subr.mxu0 0.0
  %1079 = vmatpush1.msra.mxu0 %v1039
  %1080 = vmatprep.subr.mxu0 0.0
  %1081 = vmatpush2.msra.mxu0 0.0
  %1082 = vmatprep.subr.mxu0 0.0
  %1083 = vmatpush2.msra.mxu0 0.0
  %1084 = vmatprep.subr.mxu0 0.0
  %1085 = vmatpush2.msra.mxu0 0.0
  %1086 = vmatprep.subr.mxu0 0.0
  %1087 = vmatpush2.msra.mxu0 0.0
  %1088 = vmatprep.subr.mxu0 0.0
  %1089 = vmatpush2.msra.mxu0 0.0
  %1090 = vmatprep.subr.mxu0 0.0
  %1091 = vmatpush2.msra.mxu0 0.0
  %1092 = vmatprep.subr.mxu0 0.0
  %1093 = vmatpush2.msra.mxu0 0.0
  %1094 = vmatprep.subr.mxu0 0.0
  %1095 = vmatpush2.msra.mxu0 0.0
  %1096 = vmatprep.subr.mxu0 0.0
  %1097 = vmatpush2.msra.mxu0 0.0
  %1098 = vmatprep.subr.mxu0 0.0
  %1099 = vmatpush2.msra.mxu0 0.0
  %1100 = vmatprep.subr.mxu0 0.0
  %1101 = vmatpush2.msra.mxu0 0.0
  %1102 = vmatprep.subr.mxu0 0.0
  %1103 = vmatpush2.msra.mxu0 0.0
  %1104 = vmatprep.subr.mxu0 0.0
  %1105 = vmatpush2.msra.mxu0 0.0
  %1106 = vmatprep.subr.mxu0 0.0
  %1107 = vmatpush2.msra.mxu0 0.0
  %1108 = vmatprep.subr.mxu0 0.0
  %1109 = vmatpush2.msra.mxu0 0.0
  %1110 = vmatprep.subr.mxu0 0.0
  %1111 = vmatpush2.msra.mxu0 0.0
  %1112 = vmatprep.mubr.f32.mxu0 0.0
  %1113 = vmatmul.mubr.f32.gmra.mxu0 %v955
  %v1114 = vpop.f32.mrf.mxu0
  %v1115 = vadd.f32 %v1047, %v1114
  %v1116 = vpop.f32.mrf.mxu0
  %1117 = vdwg.mxu0
  %v1118 = vmax.f32 %v1115, 0.0
  %v1119 = vld [vmem:[%s2 + $0x60] sm:$0xff]
  %v1120 = vld [vmem:[%s2 + $0x68] sm:$0xff]
  %v1121 = vld [vmem:[%s2 + $0x70] sm:$0xff]
  %v1122 = vld [vmem:[%s2 + $0x78] sm:$0xff]
  %v1123 = vld [vmem:[%s2 + $0x80] sm:$0xff]
  %v1124 = vld [vmem:[%s2 + $0x88] sm:$0xff]
  %v1125 = vld [vmem:[%s2 + $0x90] sm:$0xff]
  %v1126 = vld [vmem:[%s2 + $0x98] sm:$0xff]
  %v1127 = vld [vmem:[%s3 + $0x4] sm:$0x1]
  %v1128 = vlaneseq
  %v1129 = vshrl.u32 %v1128, 7
  %v1130 = vsub.s32 0, %v1129
  %v1131 = vrot.slane %v1127, %v1130
  %vm1132 = vcmask 523264
  %v1134 = vsel %vm1132, %v1118, 0
  %1136 = vmatprep.subr.mxu0 0.0
  %1137 = vmatpush1.msra.mxu0 0.0
  %1138 = vmatprep.subr.mxu0 0.0
  %1139 = vmatpush1.msra.mxu0 0.0
  %1140 = vmatprep.subr.mxu0 0.0
  %1141 = vmatpush1.msra.mxu0 0.0
  %1142 = vmatprep.subr.mxu0 0.0
  %1143 = vmatpush1.msra.mxu0 0.0
  %1144 = vmatprep.subr.mxu0 0.0
  %1145 = vmatpush1.msra.mxu0 0.0
  %1146 = vmatprep.subr.mxu0 0.0
  %1147 = vmatpush1.msra.mxu0 0.0
  %1148 = vmatprep.subr.mxu0 0.0
  %1149 = vmatpush1.msra.mxu0 0.0
  %1150 = vmatprep.subr.mxu0 0.0
  %1151 = vmatpush1.msra.mxu0 0.0
  %1152 = vmatprep.subr.mxu0 0.0
  %1153 = vmatpush1.msra.mxu0 %v1126
  %1154 = vmatprep.subr.mxu0 0.0
  %1155 = vmatpush1.msra.mxu0 %v1125
  %1156 = vmatprep.subr.mxu0 0.0
  %1157 = vmatpush1.msra.mxu0 %v1124
  %1158 = vmatprep.subr.mxu0 0.0
  %1159 = vmatpush1.msra.mxu0 %v1123
  %1160 = vmatprep.subr.mxu0 0.0
  %1161 = vmatpush1.msra.mxu0 %v1122
  %1162 = vmatprep.subr.mxu0 0.0
  %1163 = vmatpush1.msra.mxu0 %v1121
  %1164 = vmatprep.subr.mxu0 0.0
  %1165 = vmatpush1.msra.mxu0 %v1120
  %1166 = vmatprep.subr.mxu0 0.0
  %1167 = vmatpush1.msra.mxu0 %v1119
  %1168 = vmatprep.subr.mxu0 0.0
  %1169 = vmatpush2.msra.mxu0 0.0
  %1170 = vmatprep.subr.mxu0 0.0
  %1171 = vmatpush2.msra.mxu0 0.0
  %1172 = vmatprep.subr.mxu0 0.0
  %1173 = vmatpush2.msra.mxu0 0.0
  %1174 = vmatprep.subr.mxu0 0.0
  %1175 = vmatpush2.msra.mxu0 0.0
  %1176 = vmatprep.subr.mxu0 0.0
  %1177 = vmatpush2.msra.mxu0 0.0
  %1178 = vmatprep.subr.mxu0 0.0
  %1179 = vmatpush2.msra.mxu0 0.0
  %1180 = vmatprep.subr.mxu0 0.0
  %1181 = vmatpush2.msra.mxu0 0.0
  %1182 = vmatprep.subr.mxu0 0.0
  %1183 = vmatpush2.msra.mxu0 0.0
  %1184 = vmatprep.subr.mxu0 0.0
  %1185 = vmatpush2.msra.mxu0 0.0
  %1186 = vmatprep.subr.mxu0 0.0
  %1187 = vmatpush2.msra.mxu0 0.0
  %1188 = vmatprep.subr.mxu0 0.0
  %1189 = vmatpush2.msra.mxu0 0.0
  %1190 = vmatprep.subr.mxu0 0.0
  %1191 = vmatpush2.msra.mxu0 0.0
  %1192 = vmatprep.subr.mxu0 0.0
  %1193 = vmatpush2.msra.mxu0 0.0
  %1194 = vmatprep.subr.mxu0 0.0
  %1195 = vmatpush2.msra.mxu0 0.0
  %1196 = vmatprep.subr.mxu0 0.0
  %1197 = vmatpush2.msra.mxu0 0.0
  %1198 = vmatprep.subr.mxu0 0.0
  %1199 = vmatpush2.msra.mxu0 0.0
  %1200 = vmatprep.mubr.f32.mxu0 0.0
  %1201 = vmatmul.mubr.f32.gmra.mxu0 %v1134
  %v1202 = vpop.f32.mrf.mxu0
  %v1203 = vadd.f32 %v1131, %v1202
  %v1204 = vpop.f32.mrf.mxu0
  %1205 = vdwg.mxu0
  %v1206 = vmax.f32 %v1203, 0.0
  %v1207 = vld [vmem:[%s2 + $0xa0] sm:$0xff]
  %v1208 = vld [vmem:[%s2 + $0xa8] sm:$0xff]
  %v1209 = vld [vmem:[%s2 + $0xb0] sm:$0xff]
  %v1210 = vld [vmem:[%s2 + $0xb8] sm:$0xff]
  %v1211 = vld [vmem:[%s2 + $0xc0] sm:$0xff]
  %v1212 = vld [vmem:[%s2 + $0xc8] sm:$0xff]
  %v1213 = vld [vmem:[%s2 + $0xd0] sm:$0xff]
  %v1214 = vld [vmem:[%s2 + $0xd8] sm:$0xff]
  %v1215 = vld [vmem:[%s3 + $0x5] sm:$0x1]
  %v1216 = vlaneseq
  %v1217 = vshrl.u32 %v1216, 7
  %v1218 = vsub.s32 0, %v1217
  %v1219 = vrot.slane %v1215, %v1218
  %v1221 = vsel %vm1132, %v1206, 0
  %1223 = vmatprep.subr.mxu0 0.0
  %1224 = vmatpush1.msra.mxu0 0.0
  %1225 = vmatprep.subr.mxu0 0.0
  %1226 = vmatpush1.msra.mxu0 0.0
  %1227 = vmatprep.subr.mxu0 0.0
  %1228 = vmatpush1.msra.mxu0 0.0
  %1229 = vmatprep.subr.mxu0 0.0
  %1230 = vmatpush1.msra.mxu0 0.0
  %1231 = vmatprep.subr.mxu0 0.0
  %1232 = vmatpush1.msra.mxu0 0.0
  %1233 = vmatprep.subr.mxu0 0.0
  %1234 = vmatpush1.msra.mxu0 0.0
  %1235 = vmatprep.subr.mxu0 0.0
  %1236 = vmatpush1.msra.mxu0 0.0
  %1237 = vmatprep.subr.mxu0 0.0
  %1238 = vmatpush1.msra.mxu0 0.0
  %1239 = vmatprep.subr.mxu0 0.0
  %1240 = vmatpush1.msra.mxu0 %v1214
  %1241 = vmatprep.subr.mxu0 0.0
  %1242 = vmatpush1.msra.mxu0 %v1213
  %1243 = vmatprep.subr.mxu0 0.0
  %1244 = vmatpush1.msra.mxu0 %v1212
  %1245 = vmatprep.subr.mxu0 0.0
  %1246 = vmatpush1.msra.mxu0 %v1211
  %1247 = vmatprep.subr.mxu0 0.0
  %1248 = vmatpush1.msra.mxu0 %v1210
  %1249 = vmatprep.subr.mxu0 0.0
  %1250 = vmatpush1.msra.mxu0 %v1209
  %1251 = vmatprep.subr.mxu0 0.0
  %1252 = vmatpush1.msra.mxu0 %v1208
  %1253 = vmatprep.subr.mxu0 0.0
  %1254 = vmatpush1.msra.mxu0 %v1207
  %1255 = vmatprep.subr.mxu0 0.0
  %1256 = vmatpush2.msra.mxu0 0.0
  %1257 = vmatprep.subr.mxu0 0.0
  %1258 = vmatpush2.msra.mxu0 0.0
  %1259 = vmatprep.subr.mxu0 0.0
  %1260 = vmatpush2.msra.mxu0 0.0
  %1261 = vmatprep.subr.mxu0 0.0
  %1262 = vmatpush2.msra.mxu0 0.0
  %1263 = vmatprep.subr.mxu0 0.0
  %1264 = vmatpush2.msra.mxu0 0.0
  %1265 = vmatprep.subr.mxu0 0.0
  %1266 = vmatpush2.msra.mxu0 0.0
  %1267 = vmatprep.subr.mxu0 0.0
  %1268 = vmatpush2.msra.mxu0 0.0
  %1269 = vmatprep.subr.mxu0 0.0
  %1270 = vmatpush2.msra.mxu0 0.0
  %1271 = vmatprep.subr.mxu0 0.0
  %1272 = vmatpush2.msra.mxu0 0.0
  %1273 = vmatprep.subr.mxu0 0.0
  %1274 = vmatpush2.msra.mxu0 0.0
  %1275 = vmatprep.subr.mxu0 0.0
  %1276 = vmatpush2.msra.mxu0 0.0
  %1277 = vmatprep.subr.mxu0 0.0
  %1278 = vmatpush2.msra.mxu0 0.0
  %1279 = vmatprep.subr.mxu0 0.0
  %1280 = vmatpush2.msra.mxu0 0.0
  %1281 = vmatprep.subr.mxu0 0.0
  %1282 = vmatpush2.msra.mxu0 0.0
  %1283 = vmatprep.subr.mxu0 0.0
  %1284 = vmatpush2.msra.mxu0 0.0
  %1285 = vmatprep.subr.mxu0 0.0
  %1286 = vmatpush2.msra.mxu0 0.0
  %1287 = vmatprep.mubr.f32.mxu0 0.0
  %1288 = vmatmul.mubr.f32.gmra.mxu0 %v1221
  %v1289 = vpop.f32.mrf.mxu0
  %v1290 = vadd.f32 %v1219, %v1289
  %v1291 = vpop.f32.mrf.mxu0
  %1292 = vdwg.mxu0
  %vm1293 = vcmask 254976
  %v1294 = vsel %vm1293, %v1290, -inf
  %1295 = vmax.xlane.f32.xlu0 %v1294
  %v1296 = vpop.xlane.xlu0 %1295
  %v1297 = vsub.f32 %v1290, %v1296
  %v1298 = vmul.f32 %v1297, 1.442695
  %v1299 = vpow.pop %v1298
  %v1300 = vsel %vm1293, %v1299, 0.0
  %1301 = vadd.xlane.f32.xlu0 %v1300
  %v1302 = vpop.xlane.xlu0 %1301
  %v1303 = vrcp.pop %v1302
  %v1304 = vmul.f32 %v1299, %v1303
  %v1305 = vld [vmem:[%s2 + $0xe0] sm:$0xff]
  %v1306 = vld [vmem:[%s2 + $0xe8] sm:$0xff]
  %v1307 = vld [vmem:[%s2 + $0xf0] sm:$0xff]
  %v1308 = vld [vmem:[%s2 + $0xf8] sm:$0xff]
  %v1309 = vld [vmem:[%s3 + $0x6] sm:$0x1]
  %v1310 = vlaneseq
  %v1311 = vshrl.u32 %v1310, 7
  %v1312 = vsub.s32 0, %v1311
  %v1313 = vrot.slane %v1309, %v1312
  %v1315 = vsel %vm871, %v1290, 0
  %1317 = vmatprep.subr.mxu0 0.0
  %1318 = vmatpush1.msra.mxu0 0.0
  %1319 = vmatprep.subr.mxu0 0.0
  %1320 = vmatpush1.msra.mxu0 0.0
  %1321 = vmatprep.subr.mxu0 0.0
  %1322 = vmatpush1.msra.mxu0 0.0
  %1323 = vmatprep.subr.mxu0 0.0
  %1324 = vmatpush1.msra.mxu0 0.0
  %1325 = vmatprep.subr.mxu0 0.0
  %1326 = vmatpush1.msra.mxu0 0.0
  %1327 = vmatprep.subr.mxu0 0.0
  %1328 = vmatpush1.msra.mxu0 0.0
  %1329 = vmatprep.subr.mxu0 0.0
  %1330 = vmatpush1.msra.mxu0 0.0
  %1331 = vmatprep.subr.mxu0 0.0
  %1332 = vmatpush1.msra.mxu0 0.0
  %1333 = vmatprep.subr.mxu0 0.0
  %1334 = vmatpush1.msra.mxu0 0.0
  %1335 = vmatprep.subr.mxu0 0.0
  %1336 = vmatpush1.msra.mxu0 0.0
  %1337 = vmatprep.subr.mxu0 0.0
  %1338 = vmatpush1.msra.mxu0 0.0
  %1339 = vmatprep.subr.mxu0 0.0
  %1340 = vmatpush1.msra.mxu0 0.0
  %1341 = vmatprep.subr.mxu0 0.0
  %1342 = vmatpush1.msra.mxu0 %v1308
  %1343 = vmatprep.subr.mxu0 0.0
  %1344 = vmatpush1.msra.mxu0 %v1307
  %1345 = vmatprep.subr.mxu0 0.0
  %1346 = vmatpush1.msra.mxu0 %v1306
  %1347 = vmatprep.subr.mxu0 0.0
  %1348 = vmatpush1.msra.mxu0 %v1305
  %1349 = vmatprep.subr.mxu0 0.0
  %1350 = vmatpush2.msra.mxu0 0.0
  %1351 = vmatprep.subr.mxu0 0.0
  %1352 = vmatpush2.msra.mxu0 0.0
  %1353 = vmatprep.subr.mxu0 0.0
  %1354 = vmatpush2.msra.mxu0 0.0
  %1355 = vmatprep.subr.mxu0 0.0
  %1356 = vmatpush2.msra.mxu0 0.0
  %1357 = vmatprep.subr.mxu0 0.0
  %1358 = vmatpush2.msra.mxu0 0.0
  %1359 = vmatprep.subr.mxu0 0.0
  %1360 = vmatpush2.msra.mxu0 0.0
  %1361 = vmatprep.subr.mxu0 0.0
  %1362 = vmatpush2.msra.mxu0 0.0
  %1363 = vmatprep.subr.mxu0 0.0
  %1364 = vmatpush2.msra.mxu0 0.0
  %1365 = vmatprep.subr.mxu0 0.0
  %1366 = vmatpush2.msra.mxu0 0.0
  %1367 = vmatprep.subr.mxu0 0.0
  %1368 = vmatpush2.msra.mxu0 0.0
  %1369 = vmatprep.subr.mxu0 0.0
  %1370 = vmatpush2.msra.mxu0 0.0
  %1371 = vmatprep.subr.mxu0 0.0
  %1372 = vmatpush2.msra.mxu0 0.0
  %1373 = vmatprep.subr.mxu0 0.0
  %1374 = vmatpush2.msra.mxu0 0.0
  %1375 = vmatprep.subr.mxu0 0.0
  %1376 = vmatpush2.msra.mxu0 0.0
  %1377 = vmatprep.subr.mxu0 0.0
  %1378 = vmatpush2.msra.mxu0 0.0
  %1379 = vmatprep.subr.mxu0 0.0
  %1380 = vmatpush2.msra.mxu0 0.0
  %1381 = vmatprep.mubr.f32.mxu0 0.0
  %1382 = vmatmul.mubr.f32.gmra.mxu0 %v1315
  %v1383 = vpop.f32.mrf.mxu0
  %v1384 = vadd.f32 %v1313, %v1383
  %v1385 = vpop.f32.mrf.mxu0
  %1386 = vdwg.mxu0
  %v1387 = vmax.f32 %v1384, 0.0
  %v1388 = vld [vmem:[%s2 + $0x100] sm:$0xff]
  %v1389 = vld [vmem:[%s2 + $0x108] sm:$0xff]
  %v1390 = vld [vmem:[%s2 + $0x110] sm:$0xff]
  %v1391 = vld [vmem:[%s2 + $0x118] sm:$0xff]
  %v1392 = vld [vmem:[%s2 + $0x120] sm:$0xff]
  %v1393 = vld [vmem:[%s2 + $0x128] sm:$0xff]
  %v1394 = vld [vmem:[%s2 + $0x130] sm:$0xff]
  %v1395 = vld [vmem:[%s2 + $0x138] sm:$0xff]
  %v1396 = vld [vmem:[%s3 + $0x7] sm:$0x1]
  %v1397 = vlaneseq
  %v1398 = vshrl.u32 %v1397, 7
  %v1399 = vsub.s32 0, %v1398
  %v1400 = vrot.slane %v1396, %v1399
  %v1402 = vsel %vm1132, %v1387, 0
  %1404 = vmatprep.subr.mxu0 0.0
  %1405 = vmatpush1.msra.mxu0 0.0
  %1406 = vmatprep.subr.mxu0 0.0
  %1407 = vmatpush1.msra.mxu0 0.0
  %1408 = vmatprep.subr.mxu0 0.0
  %1409 = vmatpush1.msra.mxu0 0.0
  %1410 = vmatprep.subr.mxu0 0.0
  %1411 = vmatpush1.msra.mxu0 0.0
  %1412 = vmatprep.subr.mxu0 0.0
  %1413 = vmatpush1.msra.mxu0 0.0
  %1414 = vmatprep.subr.mxu0 0.0
  %1415 = vmatpush1.msra.mxu0 0.0
  %1416 = vmatprep.subr.mxu0 0.0
  %1417 = vmatpush1.msra.mxu0 0.0
  %1418 = vmatprep.subr.mxu0 0.0
  %1419 = vmatpush1.msra.mxu0 0.0
  %1420 = vmatprep.subr.mxu0 0.0
  %1421 = vmatpush1.msra.mxu0 %v1395
  %1422 = vmatprep.subr.mxu0 0.0
  %1423 = vmatpush1.msra.mxu0 %v1394
  %1424 = vmatprep.subr.mxu0 0.0
  %1425 = vmatpush1.msra.mxu0 %v1393
  %1426 = vmatprep.subr.mxu0 0.0
  %1427 = vmatpush1.msra.mxu0 %v1392
  %1428 = vmatprep.subr.mxu0 0.0
  %1429 = vmatpush1.msra.mxu0 %v1391
  %1430 = vmatprep.subr.mxu0 0.0
  %1431 = vmatpush1.msra.mxu0 %v1390
  %1432 = vmatprep.subr.mxu0 0.0
  %1433 = vmatpush1.msra.mxu0 %v1389
  %1434 = vmatprep.subr.mxu0 0.0
  %1435 = vmatpush1.msra.mxu0 %v1388
  %1436 = vmatprep.subr.mxu0 0.0
  %1437 = vmatpush2.msra.mxu0 0.0
  %1438 = vmatprep.subr.mxu0 0.0
  %1439 = vmatpush2.msra.mxu0 0.0
  %1440 = vmatprep.subr.mxu0 0.0
  %1441 = vmatpush2.msra.mxu0 0.0
  %1442 = vmatprep.subr.mxu0 0.0
  %1443 = vmatpush2.msra.mxu0 0.0
  %1444 = vmatprep.subr.mxu0 0.0
  %1445 = vmatpush2.msra.mxu0 0.0
  %1446 = vmatprep.subr.mxu0 0.0
  %1447 = vmatpush2.msra.mxu0 0.0
  %1448 = vmatprep.subr.mxu0 0.0
  %1449 = vmatpush2.msra.mxu0 0.0
  %1450 = vmatprep.subr.mxu0 0.0
  %1451 = vmatpush2.msra.mxu0 0.0
  %1452 = vmatprep.subr.mxu0 0.0
  %1453 = vmatpush2.msra.mxu0 0.0
  %1454 = vmatprep.subr.mxu0 0.0
  %1455 = vmatpush2.msra.mxu0 0.0
  %1456 = vmatprep.subr.mxu0 0.0
  %1457 = vmatpush2.msra.mxu0 0.0
  %1458 = vmatprep.subr.mxu0 0.0
  %1459 = vmatpush2.msra.mxu0 0.0
  %1460 = vmatprep.subr.mxu0 0.0
  %1461 = vmatpush2.msra.mxu0 0.0
  %1462 = vmatprep.subr.mxu0 0.0
  %1463 = vmatpush2.msra.mxu0 0.0
  %1464 = vmatprep.subr.mxu0 0.0
  %1465 = vmatpush2.msra.mxu0 0.0
  %1466 = vmatprep.subr.mxu0 0.0
  %1467 = vmatpush2.msra.mxu0 0.0
  %1468 = vmatprep.mubr.f32.mxu0 0.0
  %1469 = vmatmul.mubr.f32.gmra.mxu0 %v1402
  %v1470 = vpop.f32.mrf.mxu0
  %v1471 = vadd.f32 %v1400, %v1470
  %v1472 = vpop.f32.mrf.mxu0
  %1473 = vdwg.mxu0
  %v1474 = vmax.f32 %v1471, 0.0
  %v1475 = vld [vmem:[%s2 + $0x140] sm:$0xff]
  %v1476 = vld [vmem:[%s2 + $0x148] sm:$0xff]
  %v1477 = vld [vmem:[%s2 + $0x150] sm:$0xff]
  %v1478 = vld [vmem:[%s2 + $0x158] sm:$0xff]
  %v1479 = vld [vmem:[%s2 + $0x160] sm:$0xff]
  %v1480 = vld [vmem:[%s2 + $0x168] sm:$0xff]
  %v1481 = vld [vmem:[%s2 + $0x170] sm:$0xff]
  %v1482 = vld [vmem:[%s2 + $0x178] sm:$0xff]
  %v1483 = vld [vmem:[%s3 + $0x8] sm:$0x1]
  %v1484 = vlaneseq
  %v1485 = vshrl.u32 %v1484, 7
  %v1486 = vsub.s32 0, %v1485
  %v1487 = vrot.slane %v1483, %v1486
  %v1489 = vsel %vm1132, %v1474, 0
  %1491 = vmatprep.subr.mxu0 0.0
  %1492 = vmatpush1.msra.mxu0 0.0
  %1493 = vmatprep.subr.mxu0 0.0
  %1494 = vmatpush1.msra.mxu0 0.0
  %1495 = vmatprep.subr.mxu0 0.0
  %1496 = vmatpush1.msra.mxu0 0.0
  %1497 = vmatprep.subr.mxu0 0.0
  %1498 = vmatpush1.msra.mxu0 0.0
  %1499 = vmatprep.subr.mxu0 0.0
  %1500 = vmatpush1.msra.mxu0 0.0
  %1501 = vmatprep.subr.mxu0 0.0
  %1502 = vmatpush1.msra.mxu0 0.0
  %1503 = vmatprep.subr.mxu0 0.0
  %1504 = vmatpush1.msra.mxu0 0.0
  %1505 = vmatprep.subr.mxu0 0.0
  %1506 = vmatpush1.msra.mxu0 0.0
  %1507 = vmatprep.subr.mxu0 0.0
  %1508 = vmatpush1.msra.mxu0 %v1482
  %1509 = vmatprep.subr.mxu0 0.0
  %1510 = vmatpush1.msra.mxu0 %v1481
  %1511 = vmatprep.subr.mxu0 0.0
  %1512 = vmatpush1.msra.mxu0 %v1480
  %1513 = vmatprep.subr.mxu0 0.0
  %1514 = vmatpush1.msra.mxu0 %v1479
  %1515 = vmatprep.subr.mxu0 0.0
  %1516 = vmatpush1.msra.mxu0 %v1478
  %1517 = vmatprep.subr.mxu0 0.0
  %1518 = vmatpush1.msra.mxu0 %v1477
  %1519 = vmatprep.subr.mxu0 0.0
  %1520 = vmatpush1.msra.mxu0 %v1476
  %1521 = vmatprep.subr.mxu0 0.0
  %1522 = vmatpush1.msra.mxu0 %v1475
  %1523 = vmatprep.subr.mxu0 0.0
  %1524 = vmatpush2.msra.mxu0 0.0
  %1525 = vmatprep.subr.mxu0 0.0
  %1526 = vmatpush2.msra.mxu0 0.0
  %1527 = vmatprep.subr.mxu0 0.0
  %1528 = vmatpush2.msra.mxu0 0.0
  %1529 = vmatprep.subr.mxu0 0.0
  %1530 = vmatpush2.msra.mxu0 0.0
  %1531 = vmatprep.subr.mxu0 0.0
  %1532 = vmatpush2.msra.mxu0 0.0
  %1533 = vmatprep.subr.mxu0 0.0
  %1534 = vmatpush2.msra.mxu0 0.0
  %1535 = vmatprep.subr.mxu0 0.0
  %1536 = vmatpush2.msra.mxu0 0.0
  %1537 = vmatprep.subr.mxu0 0.0
  %1538 = vmatpush2.msra.mxu0 0.0
  %1539 = vmatprep.subr.mxu0 0.0
  %1540 = vmatpush2.msra.mxu0 0.0
  %1541 = vmatprep.subr.mxu0 0.0
  %1542 = vmatpush2.msra.mxu0 0.0
  %1543 = vmatprep.subr.mxu0 0.0
  %1544 = vmatpush2.msra.mxu0 0.0
  %1545 = vmatprep.subr.mxu0 0.0
  %1546 = vmatpush2.msra.mxu0 0.0
  %1547 = vmatprep.subr.mxu0 0.0
  %1548 = vmatpush2.msra.mxu0 0.0
  %1549 = vmatprep.subr.mxu0 0.0
  %1550 = vmatpush2.msra.mxu0 0.0
  %1551 = vmatprep.subr.mxu0 0.0
  %1552 = vmatpush2.msra.mxu0 0.0
  %1553 = vmatprep.subr.mxu0 0.0
  %1554 = vmatpush2.msra.mxu0 0.0
  %1555 = vmatprep.mubr.f32.mxu0 0.0
  %1556 = vmatmul.mubr.f32.gmra.mxu0 %v1489
  %v1557 = vpop.f32.mrf.mxu0
  %v1558 = vadd.f32 %v1487, %v1557
  %v1559 = vpop.f32.mrf.mxu0
  %1560 = vdwg.mxu0
  %1561 = vst [vmem:[%s4] sm:$0x3f] 0.0
  %1562 = vst.msk [vmem:[%s4] sm:$0x3] %vm1027, %v1038
  %1563 = vst.msk [vmem:[%s4 + $0x2] sm:$0x3] %vm1293, %v1304
  %1564 = vst.msk [vmem:[%s4 + $0x4] sm:$0x3] %vm1027, %v1558
  // Predicated region
  $region18: #{totalnet_forward.1} parent=0 // pred_check
    _
  $region19: #{totalnet_forward.1} parent=0 // pred_check_branch
    %1566 = sbr.rel (0) target = $region21
  $region20: #{totalnet_forward.1} parent=0 // pred_region
    _
  $region21: #{totalnet_forward.1} parent=0 // pred_fallthru
    _
  // Predicated region
  $region22: #{totalnet_forward.1} parent=0 // pred_check
    _
  $region23: #{totalnet_forward.1} parent=0 // pred_check_branch
    %1568 = sbr.rel (0) target = $region25
  $region24: #{totalnet_forward.1} parent=0 // pred_region
    _
  $region25: #{totalnet_forward.1} parent=0 // pred_fallthru
    _

</llo_original>
